<compile_context>
chip_gen: v7x
topology: tpu7x:2x2x1
jax: 0.10.0
libtpu: 0.0.40
codegen_flags: <defaults>
</compile_context>

<pallas_src>
import functools
import math

import jax
import jax.numpy as jnp
from jax.experimental import pallas as pl
from jax.experimental.pallas import tpu as pltpu

_NEG_BIG = -1e30  # finite "minus infinity": exp(_NEG_BIG - m) == 0.0, no inf-inf NaNs


def _round_up(n, m):
    return (n + m - 1) // m * m


def _default_batch_tile():
    """Generation-aware default batch tile (arithmetic intensity = tb FLOP / bank byte)."""
    try:
        kind = jax.devices()[0].device_kind.lower()
    except Exception:
        return 512
    if "v5 lite" in kind or "v5e" in kind or "v5lite" in kind:
        return 256          # already MXU-bound at 256 on v5e
    if "v6" in kind:
        return 1024         # v6e crossover ~650 FLOP/B
    return 512              # v7x crossover ~310 FLOP/B; safe default elsewhere


def _vmem_budget_bytes():
    """~75% of physical VMEM; conservative fallback (v7x = 64 MiB) if the query fails."""
    try:
        cap = int(pltpu.get_tpu_info().vmem_capacity_bytes)
    except Exception:
        cap = 64 << 20
    return (cap * 3) // 4


def _one_sided_energy_kernel(x_ref, mem_ref, out_ref,
                             xn_ref, m_a_ref, l_a_ref, m_b_ref, l_b_ref,
                             *, n_a, n_b, beta_a, beta_b, tm,
                             na_tiles, nb_tiles, normalize, use_const_max):
    # x_ref:   [TB, F]      query tile (batch-major, no wrapper transpose)
    # mem_ref: [TM, F]      one tile of the beta-scaled, normalized memory bank
    # out_ref: [1, 1, TB]   one-sided energy per query (lane-dense)
    # xn_ref:  [TB, F]      cached normalized queries (matmul dtype)
    # m_*/l_*: [1, TB]      logsumexp shift / running sum per half
    j = pl.program_id(1)
    nj = pl.num_programs(1)

    @pl.when(j == 0)
    def _init():
        x = x_ref[...].astype(jnp.float32)
        if normalize:
            ssq = jnp.sum(x * x, axis=1, keepdims=True)          # [TB, 1]
            # == x / max(||x||, 1e-12), via rsqrt (EUP) instead of sqrt + divide
            x = x * jax.lax.rsqrt(jnp.maximum(ssq, 1e-24))
        xn_ref[...] = x.astype(xn_ref.dtype)
        if use_const_max:
            # unit-norm patterns & queries => s in [-beta, +beta]; use beta as the LSE shift
            m_a_ref[...] = jnp.full(m_a_ref.shape, beta_a, m_a_ref.dtype)
            m_b_ref[...] = jnp.full(m_b_ref.shape, beta_b, m_b_ref.dtype)
        else:
            m_a_ref[...] = jnp.full(m_a_ref.shape, _NEG_BIG, m_a_ref.dtype)
            m_b_ref[...] = jnp.full(m_b_ref.shape, _NEG_BIG, m_b_ref.dtype)
        l_a_ref[...] = jnp.zeros(l_a_ref.shape, l_a_ref.dtype)
        l_b_ref[...] = jnp.zeros(l_b_ref.shape, l_b_ref.dtype)

    # s[p, q] = beta_half * <pattern_p, xn_q>   (beta folded into mem at prep time)
    # Contract the feature (lane) dims of both operands -> [TM, TB], batch on lanes.
    s = jax.lax.dot_general(
        mem_ref[...], xn_ref[...],
        dimension_numbers=(((1,), (1,)), ((), ())),
        preferred_element_type=jnp.float32)

    def masked_scores(n_valid, tiles_before):
        # Only ever evaluated on the single ragged tile of a half.
        row = ((j - tiles_before) * tm
               + jax.lax.broadcasted_iota(jnp.int32, s.shape, 0))
        return jnp.where(row < n_valid, s, _NEG_BIG)

    def half_update(m_ref, l_ref, beta_half, sv):
        if use_const_max:
            # Fixed shift: no running max, no rescale of l.
            l_ref[...] += jnp.sum(jnp.exp(sv - beta_half), axis=0, keepdims=True)
        else:
            m_prev = m_ref[...]
            m_new = jnp.maximum(m_prev, jnp.max(sv, axis=0, keepdims=True))
            l_ref[...] = (jnp.exp(m_prev - m_new) * l_ref[...]
                          + jnp.sum(jnp.exp(sv - m_new), axis=0, keepdims=True))
            m_ref[...] = m_new

    ragged_a = (n_a % tm) != 0
    ragged_b = (n_b % tm) != 0
    ragged_a_idx = n_a // tm                  # last a-tile (only meaningful if ragged_a)
    ragged_b_idx = na_tiles + n_b // tm       # last b-tile (only meaningful if ragged_b)

    # ---- a half: mask only the ragged tile ----
    if ragged_a:
        @pl.when(j == ragged_a_idx)
        def _a_ragged():
            half_update(m_a_ref, l_a_ref, beta_a, masked_scores(n_a, 0))

        if na_tiles > 1:
            @pl.when(jnp.logical_and(j < na_tiles, j != ragged_a_idx))
            def _a_full():
                half_update(m_a_ref, l_a_ref, beta_a, s)
    else:
        @pl.when(j < na_tiles)
        def _a_full():
            half_update(m_a_ref, l_a_ref, beta_a, s)

    # ---- b half: mask only the ragged tile ----
    if ragged_b:
        @pl.when(j == ragged_b_idx)
        def _b_ragged():
            half_update(m_b_ref, l_b_ref, beta_b, masked_scores(n_b, na_tiles))

        if nb_tiles > 1:
            @pl.when(jnp.logical_and(j >= na_tiles, j != ragged_b_idx))
            def _b_full():
                half_update(m_b_ref, l_b_ref, beta_b, s)
    else:
        @pl.when(j >= na_tiles)
        def _b_full():
            half_update(m_b_ref, l_b_ref, beta_b, s)

    @pl.when(j == nj - 1)
    def _finalize():
        lse_a = m_a_ref[...] + jnp.log(l_a_ref[...])   # logsumexp(beta_a * attn_a), [1, TB]
        lse_b = m_b_ref[...] + jnp.log(l_b_ref[...])
        a_energy = -(lse_a - math.log(n_a)) / beta_a
        b_energy = -(lse_b - math.log(n_b)) / beta_b
        out_ref[...] = (a_energy - b_energy)[None]     # [1, 1, TB]


def make_one_sided_energy(a, b, beta_a, beta_b, *, normalize=True,
                          tb=None, tm=1024, mem_dtype=jnp.bfloat16,
                          max_mode="auto", vmem_budget_bytes=None):
    """One-time preprocessing of the memory bank; returns energy_fn(x: [B,F]) -> [B]."""
    a = jnp.asarray(a, jnp.float32)
    b = jnp.asarray(b, jnp.float32)
    n_a, feat = a.shape
    n_b, feat_b = b.shape
    assert feat == feat_b, "a and b must share the feature dimension"
    assert n_a > 0 and n_b > 0
    beta_a = float(beta_a)
    beta_b = float(beta_b)

    if tb is None:
        tb = _default_batch_tile()
    assert tb % 128 == 0 and tm % 128 == 0, "tb/tm must be multiples of 128"

    if normalize:
        a = a * jax.lax.rsqrt(jnp.maximum(jnp.sum(a * a, -1, keepdims=True), 1e-24))
        b = b * jax.lax.rsqrt(jnp.maximum(jnp.sum(b * b, -1, keepdims=True), 1e-24))

    if max_mode == "const":
        use_const_max = True
    elif max_mode == "online":
        use_const_max = False
    else:  # "auto": |s|<=beta needs unit norms; exp(s-beta) must not underflow (beta<~40)
        use_const_max = normalize and max(beta_a, beta_b) <= 32.0

    mem_bytes = jnp.dtype(mem_dtype).itemsize

    # ---- generation-aware VMEM budget and tile sizing ----
    if vmem_budget_bytes is None:
        vmem_budget_bytes = _vmem_budget_bytes()

    # Don't use a memory tile bigger than the (128-rounded) bank halves need.
    tm_eff = min(tm, _round_up(max(n_a, n_b), 128))
    tb_max = tb

    def footprint(tb_, tm_):
        return (2 * tb_ * feat * 4            # x tile, double-buffered (f32)
                + 2 * tm_ * feat * mem_bytes  # mem tile, double-buffered
                + tb_ * feat * mem_bytes      # cached normalized queries
                + 3 * tm_ * tb_ * 4           # score / exp intermediates (f32)
                + 8 * tb_ * 4)                # m/l scratch + output

    while footprint(tb_max, tm_eff) > vmem_budget_bytes and tm_eff > 128:
        tm_eff = max(128, (tm_eff // 2) // 128 * 128)
    while footprint(tb_max, tm_eff) > vmem_budget_bytes and tb_max > 128:
        tb_max = max(128, (tb_max // 2) // 128 * 128)
    vmem_limit = int(min(vmem_budget_bytes,
                         max(64 << 20, footprint(tb_max, tm_eff) + (8 << 20))))

    # Pad each half to a multiple of tm_eff; fold beta into the stored patterns
    # (pure weight preprocessing, off the hot path). Padded rows are all-zero and
    # live only in the (single) ragged tile of each half.
    ma_pad = _round_up(n_a, tm_eff)
    mb_pad = _round_up(n_b, tm_eff)
    mem = jnp.zeros((ma_pad + mb_pad, feat), jnp.float32)
    mem = mem.at[:n_a].set(a * beta_a).at[ma_pad:ma_pad + n_b].set(b * beta_b)
    mem = mem.astype(mem_dtype)
    na_tiles = ma_pad // tm_eff
    nb_tiles = mb_pad // tm_eff
    nm_tiles = na_tiles + nb_tiles

    kernel = functools.partial(
        _one_sided_energy_kernel,
        n_a=n_a, n_b=n_b, beta_a=beta_a, beta_b=beta_b, tm=tm_eff,
        na_tiles=na_tiles, nb_tiles=nb_tiles,
        normalize=normalize, use_const_max=use_const_max)

    def energy_fn(x):
        x = jnp.asarray(x)
        batch, f_in = x.shape
        assert f_in == feat
        # Lane-dense batch tile (multiple of 128); no rows silently dropped.
        tb_eff = min(tb_max, _round_up(batch, 128))
        b_pad = _round_up(batch, tb_eff)
        if b_pad != batch:
            x = jnp.pad(x, ((0, b_pad - batch), (0, 0)))
        nbt = b_pad // tb_eff

        out = pl.pallas_call(
            kernel,
            out_shape=jax.ShapeDtypeStruct((nbt, 1, tb_eff), jnp.float32),
            grid_spec=pltpu.PrefetchScalarGridSpec(
                num_scalar_prefetch=0,
                grid=(nbt, nm_tiles),                     # memory (reduction) axis last
                in_specs=[
                    pl.BlockSpec((tb_eff, feat), lambda i, j: (i, 0)),   # x tile, resident over j
                    pl.BlockSpec((tm_eff, feat), lambda i, j: (j, 0)),   # streamed memory tile
                ],
                out_specs=pl.BlockSpec((1, 1, tb_eff), lambda i, j: (i, 0, 0)),
                scratch_shapes=[
                    pltpu.VMEM((tb_eff, feat), mem_dtype),  # cached normalized queries
                    pltpu.VMEM((1, tb_eff), jnp.float32),   # m_a
                    pltpu.VMEM((1, tb_eff), jnp.float32),   # l_a
                    pltpu.VMEM((1, tb_eff), jnp.float32),   # m_b
                    pltpu.VMEM((1, tb_eff), jnp.float32),   # l_b
                ]),
            compiler_params=pltpu.CompilerParams(
                dimension_semantics=("parallel", "arbitrary"),
                vmem_limit_bytes=vmem_limit),
        )(x, mem)
        return out.reshape(-1)[:batch]

    return energy_fn


def _reference(x, a, b, beta_a, beta_b):
    # Pure-JAX f32 reference matching the PyTorch module (normalize=True).
    def nrm(v):
        return v / jnp.maximum(jnp.linalg.norm(v, axis=-1, keepdims=True), 1e-12)

    xn = nrm(x)
    mem = jnp.concatenate([nrm(a), nrm(b)], axis=0)
    attn = xn @ mem.T
    n_a = a.shape[0]

    def lme(beta, z):
        return (jax.scipy.special.logsumexp(beta * z, axis=-1)
                - math.log(z.shape[-1])) / beta

    a_e = -lme(beta_a, attn[:, :n_a])
    b_e = -lme(beta_b, attn[:, n_a:])
    return a_e - b_e


if __name__ == "__main__":
    key = jax.random.PRNGKey(0)
    kx, ka, kb = jax.random.split(key, 3)

    # Small, deliberately non-aligned shapes: exercise batch-tail padding and
    # per-half ragged-tile masking.
    B, F = 20, 256
    Na, Nb = 200, 136
    beta_a, beta_b = 4.0, 2.0

    x = jax.random.normal(kx, (B, F), dtype=jnp.float32)
    a = jax.random.normal(ka, (Na, F), dtype=jnp.float32)
    b = jax.random.normal(kb, (Nb, F), dtype=jnp.float32)

    ref = _reference(x, a, b, beta_a, beta_b)

    # f32 memory path, constant-max fast path (auto): tight check of tiling / masking / LSE.
    energy_f32 = make_one_sided_energy(a, b, beta_a, beta_b, tm=128,
                                       mem_dtype=jnp.float32)
    out_f32 = jax.block_until_ready(energy_f32(x))
    assert out_f32.shape == (B,)
    assert jnp.allclose(out_f32, ref, atol=1e-4, rtol=1e-3), (out_f32, ref)

    # f32 memory path, online-max fallback (large-beta code path) must match too.
    energy_online = make_one_sided_energy(a, b, beta_a, beta_b, tm=128,
                                          mem_dtype=jnp.float32, max_mode="online")
    out_online = jax.block_until_ready(energy_online(x))
    assert jnp.allclose(out_online, ref, atol=1e-4, rtol=1e-3), (out_online, ref)

    # bf16 memory path (default, fast MXU path): f32 accumulation, looser tolerance
    # accounting for bf16 quantization of the stored patterns / normalized queries.
    energy_bf16 = make_one_sided_energy(a, b, beta_a, beta_b)
    out_bf16 = jax.block_until_ready(energy_bf16(x))
    assert out_bf16.shape == (B,)
    assert jnp.allclose(out_bf16, ref, atol=2e-2, rtol=2e-2), (out_bf16, ref)

    print("KERNEL_OK")
</pallas_src>

<mosaic_0001>
module attributes {stable_mosaic.version = 11 : i64} {
  func.func @_one_sided_energy_kernel(%arg0: i32, %arg1: i32, %arg2: memref<128x256xf32, #tpu.memory_space<vmem>>, %arg3: memref<128x256xf32, #tpu.memory_space<vmem>>, %arg4: memref<1x1x128xf32, #tpu.memory_space<vmem>>, %arg5: memref<128x256xf32, #tpu.memory_space<vmem>>, %arg6: memref<1x128xf32, #tpu.memory_space<vmem>>, %arg7: memref<1x128xf32, #tpu.memory_space<vmem>>, %arg8: memref<1x128xf32, #tpu.memory_space<vmem>>, %arg9: memref<1x128xf32, #tpu.memory_space<vmem>>) attributes {dimension_semantics = [#tpu.dimension_semantics<parallel>, #tpu.dimension_semantics<arbitrary>], iteration_bounds = array<i64: 1, 4>, scalar_prefetch = 0 : i64, scratch_operands = 5 : i64, tpu.core_type = #tpu.core_type<tc>, window_params = [{transform_indices = @transform_0, window_bounds = array<i64: 128, 256>}, {transform_indices = @transform_1, window_bounds = array<i64: 128, 256>}, {transform_indices = @transform_2, window_bounds = array<i64: 1, 1, 128>}]} {
    %c0_i32 = arith.constant 0 : i32
    %0 = arith.cmpi eq, %arg1, %c0_i32 : i32
    %1 = arith.extui %0 : i1 to i32
    %c0_i32_0 = arith.constant 0 : i32
    %2 = arith.cmpi ne, %1, %c0_i32_0 : i32
    scf.if %2 {
      %c0_13 = arith.constant 0 : index
      %c0_14 = arith.constant 0 : index
      %25 = vector.load %arg2[%c0_13, %c0_14] : memref<128x256xf32, #tpu.memory_space<vmem>>, vector<128x256xf32>
      %26 = arith.mulf %25, %25 : vector<128x256xf32>
      %cst_15 = arith.constant dense<0.000000e+00> : vector<128xf32>
      %27 = vector.multi_reduction <add>, %26, %cst_15 [1] : vector<128x256xf32> to vector<128xf32>
      %28 = vector.shape_cast %27 : vector<128xf32> to vector<128x1xf32>
      %cst_16 = arith.constant 1.000000e-24 : f32
      %29 = vector.broadcast %cst_16 : f32 to vector<128x1xf32>
      %30 = arith.maximumf %28, %29 : vector<128x1xf32>
      %31 = math.rsqrt %30 : vector<128x1xf32>
      %32 = vector.broadcast %31 : vector<128x1xf32> to vector<128x256xf32>
      %33 = arith.mulf %25, %32 : vector<128x256xf32>
      %c0_17 = arith.constant 0 : index
      %c0_18 = arith.constant 0 : index
      %34 = vector.load %arg5[%c0_17, %c0_18] : memref<128x256xf32, #tpu.memory_space<vmem>>, vector<128x256xf32>
      tpu.vector_store %arg5[%c0_17, %c0_18], %33 {strides = array<i32>} : memref<128x256xf32, #tpu.memory_space<vmem>>, vector<128x256xf32>,
      %cst_19 = arith.constant 4.000000e+00 : f32
      %35 = vector.broadcast %cst_19 : f32 to vector<1x128xf32>
      %c0_20 = arith.constant 0 : index
      %c0_21 = arith.constant 0 : index
      %36 = vector.load %arg6[%c0_20, %c0_21] : memref<1x128xf32, #tpu.memory_space<vmem>>, vector<1x128xf32>
      tpu.vector_store %arg6[%c0_20, %c0_21], %35 {strides = array<i32>} : memref<1x128xf32, #tpu.memory_space<vmem>>, vector<1x128xf32>,
      %cst_22 = arith.constant 2.000000e+00 : f32
      %37 = vector.broadcast %cst_22 : f32 to vector<1x128xf32>
      %c0_23 = arith.constant 0 : index
      %c0_24 = arith.constant 0 : index
      %38 = vector.load %arg8[%c0_23, %c0_24] : memref<1x128xf32, #tpu.memory_space<vmem>>, vector<1x128xf32>
      tpu.vector_store %arg8[%c0_23, %c0_24], %37 {strides = array<i32>} : memref<1x128xf32, #tpu.memory_space<vmem>>, vector<1x128xf32>,
      %cst_25 = arith.constant 0.000000e+00 : f32
      %39 = vector.broadcast %cst_25 : f32 to vector<1x128xf32>
      %c0_26 = arith.constant 0 : index
      %c0_27 = arith.constant 0 : index
      %40 = vector.load %arg7[%c0_26, %c0_27] : memref<1x128xf32, #tpu.memory_space<vmem>>, vector<1x128xf32>
      tpu.vector_store %arg7[%c0_26, %c0_27], %39 {strides = array<i32>} : memref<1x128xf32, #tpu.memory_space<vmem>>, vector<1x128xf32>,
      %cst_28 = arith.constant 0.000000e+00 : f32
      %41 = vector.broadcast %cst_28 : f32 to vector<1x128xf32>
      %c0_29 = arith.constant 0 : index
      %c0_30 = arith.constant 0 : index
      %42 = vector.load %arg9[%c0_29, %c0_30] : memref<1x128xf32, #tpu.memory_space<vmem>>, vector<1x128xf32>
      tpu.vector_store %arg9[%c0_29, %c0_30], %41 {strides = array<i32>} : memref<1x128xf32, #tpu.memory_space<vmem>>, vector<1x128xf32>,
    } else {
    }
    %c0 = arith.constant 0 : index
    %c0_1 = arith.constant 0 : index
    %3 = vector.load %arg3[%c0, %c0_1] : memref<128x256xf32, #tpu.memory_space<vmem>>, vector<128x256xf32>
    %c0_2 = arith.constant 0 : index
    %c0_3 = arith.constant 0 : index
    %4 = vector.load %arg5[%c0_2, %c0_3] : memref<128x256xf32, #tpu.memory_space<vmem>>, vector<128x256xf32>
    %cst = arith.constant dense<0.000000e+00> : vector<128x128xf32>
    %5 = tpu.matmul %3, %4, %cst {dimension_numbers = #tpu.dot_dimension_numbers<[1], [1], [0], [0], [0, 0, 1, 0], [], []>} : vector<128x256xf32>, vector<128x256xf32>, vector<128x128xf32> -> vector<128x128xf32>
    %c1_i32 = arith.constant 1 : i32
    %6 = arith.cmpi eq, %arg1, %c1_i32 : i32
    %7 = arith.extui %6 : i1 to i32
    %c0_i32_4 = arith.constant 0 : i32
    %8 = arith.cmpi ne, %7, %c0_i32_4 : i32
    scf.if %8 {
      %c0_i32_13 = arith.constant 0 : i32
      %25 = arith.subi %arg1, %c0_i32_13 : i32
      %c128_i32 = arith.constant 128 : i32
      %26 = arith.muli %25, %c128_i32 : i32
      %27 = tpu.iota {dimensions = array<i32: 0>} : vector<128x128xi32>
      %28 = vector.broadcast %26 : i32 to vector<128x128xi32>
      %29 = arith.addi %28, %27 : vector<128x128xi32>
      %c200_i32 = arith.constant 200 : i32
      %30 = vector.broadcast %c200_i32 : i32 to vector<128x128xi32>
      %31 = arith.cmpi slt, %29, %30 : vector<128x128xi32>
      %cst_14 = arith.constant -1.000000e+30 : f32
      %32 = vector.broadcast %cst_14 : f32 to vector<128x128xf32>
      %33 = arith.select %31, %5, %32 : vector<128x128xi1>, vector<128x128xf32>
      %c0_15 = arith.constant 0 : index
      %c0_16 = arith.constant 0 : index
      %34 = vector.load %arg7[%c0_15, %c0_16] : memref<1x128xf32, #tpu.memory_space<vmem>>, vector<1x128xf32>
      %cst_17 = arith.constant 4.000000e+00 : f32
      %35 = vector.broadcast %cst_17 : f32 to vector<128x128xf32>
      %36 = arith.subf %33, %35 : vector<128x128xf32>
      %37 = math.exp %36 : vector<128x128xf32>
      %cst_18 = arith.constant dense<0.000000e+00> : vector<128xf32>
      %38 = vector.multi_reduction <add>, %37, %cst_18 [0] : vector<128x128xf32> to vector<128xf32>
      %39 = vector.shape_cast %38 : vector<128xf32> to vector<1x128xf32>
      %40 = arith.addf %34, %39 : vector<1x128xf32>
      %c0_19 = arith.constant 0 : index
      %c0_20 = arith.constant 0 : index
      %41 = vector.load %arg7[%c0_19, %c0_20] : memref<1x128xf32, #tpu.memory_space<vmem>>, vector<1x128xf32>
      tpu.vector_store %arg7[%c0_19, %c0_20], %40 {strides = array<i32>} : memref<1x128xf32, #tpu.memory_space<vmem>>, vector<1x128xf32>,
    } else {
    }
    %c2_i32 = arith.constant 2 : i32
    %9 = arith.cmpi slt, %arg1, %c2_i32 : i32
    %c1_i32_5 = arith.constant 1 : i32
    %10 = arith.cmpi ne, %arg1, %c1_i32_5 : i32
    %11 = arith.andi %9, %10 : i1
    %12 = arith.extui %11 : i1 to i32
    %c0_i32_6 = arith.constant 0 : i32
    %13 = arith.cmpi ne, %12, %c0_i32_6 : i32
    scf.if %13 {
      %c0_13 = arith.constant 0 : index
      %c0_14 = arith.constant 0 : index
      %25 = vector.load %arg7[%c0_13, %c0_14] : memref<1x128xf32, #tpu.memory_space<vmem>>, vector<1x128xf32>
      %cst_15 = arith.constant 4.000000e+00 : f32
      %26 = vector.broadcast %cst_15 : f32 to vector<128x128xf32>
      %27 = arith.subf %5, %26 : vector<128x128xf32>
      %28 = math.exp %27 : vector<128x128xf32>
      %cst_16 = arith.constant dense<0.000000e+00> : vector<128xf32>
      %29 = vector.multi_reduction <add>, %28, %cst_16 [0] : vector<128x128xf32> to vector<128xf32>
      %30 = vector.shape_cast %29 : vector<128xf32> to vector<1x128xf32>
      %31 = arith.addf %25, %30 : vector<1x128xf32>
      %c0_17 = arith.constant 0 : index
      %c0_18 = arith.constant 0 : index
      %32 = vector.load %arg7[%c0_17, %c0_18] : memref<1x128xf32, #tpu.memory_space<vmem>>, vector<1x128xf32>
      tpu.vector_store %arg7[%c0_17, %c0_18], %31 {strides = array<i32>} : memref<1x128xf32, #tpu.memory_space<vmem>>, vector<1x128xf32>,
    } else {
    }
    %c3_i32 = arith.constant 3 : i32
    %14 = arith.cmpi eq, %arg1, %c3_i32 : i32
    %15 = arith.extui %14 : i1 to i32
    %c0_i32_7 = arith.constant 0 : i32
    %16 = arith.cmpi ne, %15, %c0_i32_7 : i32
    scf.if %16 {
      %c2_i32_13 = arith.constant 2 : i32
      %25 = arith.subi %arg1, %c2_i32_13 : i32
      %c128_i32 = arith.constant 128 : i32
      %26 = arith.muli %25, %c128_i32 : i32
      %27 = tpu.iota {dimensions = array<i32: 0>} : vector<128x128xi32>
      %28 = vector.broadcast %26 : i32 to vector<128x128xi32>
      %29 = arith.addi %28, %27 : vector<128x128xi32>
      %c136_i32 = arith.constant 136 : i32
      %30 = vector.broadcast %c136_i32 : i32 to vector<128x128xi32>
      %31 = arith.cmpi slt, %29, %30 : vector<128x128xi32>
      %cst_14 = arith.constant -1.000000e+30 : f32
      %32 = vector.broadcast %cst_14 : f32 to vector<128x128xf32>
      %33 = arith.select %31, %5, %32 : vector<128x128xi1>, vector<128x128xf32>
      %c0_15 = arith.constant 0 : index
      %c0_16 = arith.constant 0 : index
      %34 = vector.load %arg9[%c0_15, %c0_16] : memref<1x128xf32, #tpu.memory_space<vmem>>, vector<1x128xf32>
      %cst_17 = arith.constant 2.000000e+00 : f32
      %35 = vector.broadcast %cst_17 : f32 to vector<128x128xf32>
      %36 = arith.subf %33, %35 : vector<128x128xf32>
      %37 = math.exp %36 : vector<128x128xf32>
      %cst_18 = arith.constant dense<0.000000e+00> : vector<128xf32>
      %38 = vector.multi_reduction <add>, %37, %cst_18 [0] : vector<128x128xf32> to vector<128xf32>
      %39 = vector.shape_cast %38 : vector<128xf32> to vector<1x128xf32>
      %40 = arith.addf %34, %39 : vector<1x128xf32>
      %c0_19 = arith.constant 0 : index
      %c0_20 = arith.constant 0 : index
      %41 = vector.load %arg9[%c0_19, %c0_20] : memref<1x128xf32, #tpu.memory_space<vmem>>, vector<1x128xf32>
      tpu.vector_store %arg9[%c0_19, %c0_20], %40 {strides = array<i32>} : memref<1x128xf32, #tpu.memory_space<vmem>>, vector<1x128xf32>,
    } else {
    }
    %c2_i32_8 = arith.constant 2 : i32
    %17 = arith.cmpi sge, %arg1, %c2_i32_8 : i32
    %c3_i32_9 = arith.constant 3 : i32
    %18 = arith.cmpi ne, %arg1, %c3_i32_9 : i32
    %19 = arith.andi %17, %18 : i1
    %20 = arith.extui %19 : i1 to i32
    %c0_i32_10 = arith.constant 0 : i32
    %21 = arith.cmpi ne, %20, %c0_i32_10 : i32
    scf.if %21 {
      %c0_13 = arith.constant 0 : index
      %c0_14 = arith.constant 0 : index
      %25 = vector.load %arg9[%c0_13, %c0_14] : memref<1x128xf32, #tpu.memory_space<vmem>>, vector<1x128xf32>
      %cst_15 = arith.constant 2.000000e+00 : f32
      %26 = vector.broadcast %cst_15 : f32 to vector<128x128xf32>
      %27 = arith.subf %5, %26 : vector<128x128xf32>
      %28 = math.exp %27 : vector<128x128xf32>
      %cst_16 = arith.constant dense<0.000000e+00> : vector<128xf32>
      %29 = vector.multi_reduction <add>, %28, %cst_16 [0] : vector<128x128xf32> to vector<128xf32>
      %30 = vector.shape_cast %29 : vector<128xf32> to vector<1x128xf32>
      %31 = arith.addf %25, %30 : vector<1x128xf32>
      %c0_17 = arith.constant 0 : index
      %c0_18 = arith.constant 0 : index
      %32 = vector.load %arg9[%c0_17, %c0_18] : memref<1x128xf32, #tpu.memory_space<vmem>>, vector<1x128xf32>
      tpu.vector_store %arg9[%c0_17, %c0_18], %31 {strides = array<i32>} : memref<1x128xf32, #tpu.memory_space<vmem>>, vector<1x128xf32>,
    } else {
    }
    %c3_i32_11 = arith.constant 3 : i32
    %22 = arith.cmpi eq, %arg1, %c3_i32_11 : i32
    %23 = arith.extui %22 : i1 to i32
    %c0_i32_12 = arith.constant 0 : i32
    %24 = arith.cmpi ne, %23, %c0_i32_12 : i32
    scf.if %24 {
      %c0_13 = arith.constant 0 : index
      %c0_14 = arith.constant 0 : index
      %25 = vector.load %arg6[%c0_13, %c0_14] : memref<1x128xf32, #tpu.memory_space<vmem>>, vector<1x128xf32>
      %c0_15 = arith.constant 0 : index
      %c0_16 = arith.constant 0 : index
      %26 = vector.load %arg7[%c0_15, %c0_16] : memref<1x128xf32, #tpu.memory_space<vmem>>, vector<1x128xf32>
      %27 = math.log %26 : vector<1x128xf32>
      %28 = arith.addf %25, %27 : vector<1x128xf32>
      %c0_17 = arith.constant 0 : index
      %c0_18 = arith.constant 0 : index
      %29 = vector.load %arg8[%c0_17, %c0_18] : memref<1x128xf32, #tpu.memory_space<vmem>>, vector<1x128xf32>
      %c0_19 = arith.constant 0 : index
      %c0_20 = arith.constant 0 : index
      %30 = vector.load %arg9[%c0_19, %c0_20] : memref<1x128xf32, #tpu.memory_space<vmem>>, vector<1x128xf32>
      %31 = math.log %30 : vector<1x128xf32>
      %32 = arith.addf %29, %31 : vector<1x128xf32>
      %cst_21 = arith.constant 5.29831743 : f32
      %33 = vector.broadcast %cst_21 : f32 to vector<1x128xf32>
      %34 = arith.subf %28, %33 : vector<1x128xf32>
      %cst_22 = arith.constant 0.000000e+00 : f32
      %35 = vector.broadcast %cst_22 : f32 to vector<1x128xf32>
      %36 = arith.subf %35, %34 : vector<1x128xf32>
      %cst_23 = arith.constant 4.000000e+00 : f32
      %37 = vector.broadcast %cst_23 : f32 to vector<1x128xf32>
      %38 = arith.divf %36, %37 : vector<1x128xf32>
      %cst_24 = arith.constant 4.91265488 : f32
      %39 = vector.broadcast %cst_24 : f32 to vector<1x128xf32>
      %40 = arith.subf %32, %39 : vector<1x128xf32>
      %cst_25 = arith.constant 0.000000e+00 : f32
      %41 = vector.broadcast %cst_25 : f32 to vector<1x128xf32>
      %42 = arith.subf %41, %40 : vector<1x128xf32>
      %cst_26 = arith.constant 2.000000e+00 : f32
      %43 = vector.broadcast %cst_26 : f32 to vector<1x128xf32>
      %44 = arith.divf %42, %43 : vector<1x128xf32>
      %45 = arith.subf %38, %44 : vector<1x128xf32>
      %46 = vector.shape_cast %45 : vector<1x128xf32> to vector<1x1x128xf32>
      %c0_27 = arith.constant 0 : index
      %c0_28 = arith.constant 0 : index
      %c0_29 = arith.constant 0 : index
      %47 = vector.load %arg4[%c0_27, %c0_28, %c0_29] : memref<1x1x128xf32, #tpu.memory_space<vmem>>, vector<1x1x128xf32>
      tpu.vector_store %arg4[%c0_27, %c0_28, %c0_29], %46 {strides = array<i32>} : memref<1x1x128xf32, #tpu.memory_space<vmem>>, vector<1x1x128xf32>,
    } else {
    }
    return
  }
  func.func @transform_0(%arg0: i32, %arg1: i32) -> (i32, i32) {
    %c0_i32 = arith.constant 0 : i32
    %c0_i32_0 = arith.constant 0 : i32
    return %arg0, %c0_i32 : i32, i32
  }
  func.func @transform_1(%arg0: i32, %arg1: i32) -> (i32, i32) {
    %c0_i32 = arith.constant 0 : i32
    %c0_i32_0 = arith.constant 0 : i32
    return %arg1, %c0_i32 : i32, i32
  }
  func.func @transform_2(%arg0: i32, %arg1: i32) -> (i32, i32, i32) {
    %c0_i32 = arith.constant 0 : i32
    %c0_i32_0 = arith.constant 0 : i32
    %c0_i32_1 = arith.constant 0 : i32
    return %arg0, %c0_i32, %c0_i32_0 : i32, i32, i32
  }
}

</mosaic_0001>

<llo_original>
// kernel: tpu_custom_call.1
$region0: #{tpu_custom_call.1}
  #allocation0 [shape = 'u32[]', space=smem, size = 0x4, offset = 0x4, fixed_abs, tag = 'smem constant byte address 0x4 - core index']
  #allocation1 [shape = 'u32[144,128]{1,0:T(1,128)}', space=vmem, size = 0x12000, scoped, tag = 'internal scratch']
  #allocation2 [shape = 'f32[128,256]{1,0:T(8,128)}', space=vmem, size = 0x20000, scoped, tag = 'scratch operand']
  #allocation3 [shape = 'f32[1,128]{1,0:T(1,128)}', space=vmem, size = 0x200, scoped, tag = 'scratch operand']
  #allocation4 [shape = 'f32[1,128]{1,0:T(1,128)}', space=vmem, size = 0x200, scoped, tag = 'scratch operand']
  #allocation5 [shape = 'f32[1,128]{1,0:T(1,128)}', space=vmem, size = 0x200, scoped, tag = 'scratch operand']
  #allocation6 [shape = 'f32[1,128]{1,0:T(1,128)}', space=vmem, size = 0x200, scoped, tag = 'scratch operand']
  %s0 = inlined_call_operand.hbm [shape: f32[128,256], index: 0, kind: input, shape index: {}]
  %s1 = inlined_call_operand.hbm [shape: f32[512,256], index: 1, kind: input, shape index: {}]
  %s2 = inlined_call_operand.hbm [shape: f32[1,1,128], index: 2, kind: output, shape index: {}]
  %s3 = sld [smem:[#allocation0]]
  $region73: #{tpu_custom_call.1} parent=0
    _
  %s5 = ssub.s32 1, %s3
  %s6 = scalar_select 0, %s5, %s3
  $region1: #{tpu_custom_call.1} parent=0
    #allocation7 [shape = 'u8[131072]{0}', space=vmem, size = 0x20000, scoped, tag = 'input window, operand 0, single buffered']
    #allocation8 [shape = 's32[2]{0}', space=sflag, size = 0x8, scoped, tag = 'scoped memory for tpu_custom_call.1']
    #allocation9 [shape = 's32[2]{0}', space=sflag, size = 0x8, scoped, tag = 'scoped memory for tpu_custom_call.1']
    #allocation10 [shape = 'u8[262144]{0}', space=vmem, size = 0x40000, scoped, tag = 'input window, operand 1']
    #allocation11 [shape = 's32[2]{0}', space=sflag, size = 0x8, scoped, tag = 'scoped memory for tpu_custom_call.1']
    #allocation12 [shape = 'u8[512]{0}', space=vmem, size = 0x400, scoped, tag = 'output window, operand 0, single buffered']
    %7 = vsyncpa [#allocation8], 0
    %8 = vsyncpa [#allocation11], 0
    %s9 = scalar_lea.sflag [#allocation11], 1
    %10 = vsyncpa %s9, 0
    %11 = vsyncpa [#allocation9], 0
    loop: start=0, step=1, limit=6
    $region2: #{tpu_custom_call.1} parent=1 // loop_pre_header
      _
    $region3: #{tpu_custom_call.1} parent=1 // loop_header
      %s13 = sphi 0, %s17
      %p14 = scmp.ge.s32.totalorder %s13, 6
      %s20 = sphi 0, %s32
      %s21 = sphi 0, %s28
      %s22 = sphi 0, %s20
      %s23 = sphi 0, %s21
      %s24 = sphi 0, %s22
      %s25 = sphi 0, %s23
      %s35 = sphi 0, %s37
      %s38 = sphi 0, %s35
      %s39 = sphi 0, %s38
      %s55 = sphi 0, %s39
      %s61 = sphi 0, %s63
      %s64 = sphi 0, %s61
      %s65 = sphi 0, %s64
      %s81 = sphi 0, %s65
      %s87 = sphi 0, %s89
      %s90 = sphi 0, %s87
      %s91 = sphi 0, %s90
      %s107 = sphi 0, %s91
    $region4: #{tpu_custom_call.1} parent=1 // loop_header_branch
      %16 = sbr.rel (%p14) target = $region8
    $region5: #{tpu_custom_call.1} parent=1 // loop_body
      %s18 = ssub.s32 %s13, 1
      %s19 = ssub.s32 %s13, 2
      %s26 = sadd.s32 1, %s21
      %p27 = scmp.ge.s32.totalorder %s26, 4
      %s28 = scalar_select %p27, 0, %s26
      %s29 = sadd.s32 1, %s20
      %s30 = scalar_select %p27, %s29, %s20
      %p31 = scmp.ge.s32.totalorder %s30, 1
      %s32 = scalar_select %p31, 0, %s30
      %s33 = ssub.s32 %s20, %s32
      %p34 = scmp.eq.s32.totalorder %s33, 0
      %s36 = sadd.s32 %s35, 1
      %s37 = scalar_select %p34, %s35, %s36
      %p40 = pneg %p34
      %p41 = scmp.eq.s32.totalorder %s13, 3
      %p42 = por %p40, %p41
      %p43 = scmp.ne.s32.totalorder %s35, %s38
      %p44 = scmp.eq.s32.totalorder %s13, 0
      %p45 = por %p43, %p44
      %p46 = scmp.ne.s32.totalorder %s35, %s38
      %p47 = scmp.eq.s32.totalorder %s18, 3
      %p48 = por %p46, %p47
      %p49 = scmp.ne.s32.totalorder %s38, %s39
      %p50 = scmp.eq.s32.totalorder %s18, 0
      %p51 = por %p49, %p50
      %p52 = scmp.ne.s32.totalorder %s38, %s39
      %p53 = scmp.eq.s32.totalorder %s19, 3
      %p54 = por %p52, %p53
      %p56 = scmp.ne.s32.totalorder %s39, %s55
      %p57 = scmp.eq.s32.totalorder %s19, 0
      %p58 = por %p56, %p57
      %s59 = ssub.s32 %s21, %s28
      %p60 = scmp.eq.s32.totalorder %s59, 0
      %s62 = sadd.s32 %s61, 1
      %s63 = scalar_select %p60, %s61, %s62
      %p66 = pneg %p60
      %p67 = scmp.eq.s32.totalorder %s13, 3
      %p68 = por %p66, %p67
      %p69 = scmp.ne.s32.totalorder %s61, %s64
      %p70 = scmp.eq.s32.totalorder %s13, 0
      %p71 = por %p69, %p70
      %p72 = scmp.ne.s32.totalorder %s61, %s64
      %p73 = scmp.eq.s32.totalorder %s18, 3
      %p74 = por %p72, %p73
      %p75 = scmp.ne.s32.totalorder %s64, %s65
      %p76 = scmp.eq.s32.totalorder %s18, 0
      %p77 = por %p75, %p76
      %p78 = scmp.ne.s32.totalorder %s64, %s65
      %p79 = scmp.eq.s32.totalorder %s19, 3
      %p80 = por %p78, %p79
      %p82 = scmp.ne.s32.totalorder %s65, %s81
      %p83 = scmp.eq.s32.totalorder %s19, 0
      %p84 = por %p82, %p83
      %s85 = ssub.s32 %s20, %s32
      %p86 = scmp.eq.s32.totalorder %s85, 0
      %s88 = sadd.s32 %s87, 1
      %s89 = scalar_select %p86, %s87, %s88
      %p92 = pneg %p86
      %p93 = scmp.eq.s32.totalorder %s13, 3
      %p94 = por %p92, %p93
      %p95 = scmp.ne.s32.totalorder %s87, %s90
      %p96 = scmp.eq.s32.totalorder %s13, 0
      %p97 = por %p95, %p96
      %p98 = scmp.ne.s32.totalorder %s87, %s90
      %p99 = scmp.eq.s32.totalorder %s18, 3
      %p100 = por %p98, %p99
      %p101 = scmp.ne.s32.totalorder %s90, %s91
      %p102 = scmp.eq.s32.totalorder %s18, 0
      %p103 = por %p101, %p102
      %p104 = scmp.ne.s32.totalorder %s90, %s91
      %p105 = scmp.eq.s32.totalorder %s19, 3
      %p106 = por %p104, %p105
      %p108 = scmp.ne.s32.totalorder %s91, %s107
      %p109 = scmp.eq.s32.totalorder %s19, 0
      %p110 = por %p108, %p109
      %p111 = scmp.le.s32.totalorder 1, %s13
      %p112 = scmp.lt.s32.totalorder %s13, 5
      %p113 = pnand %p111, %p112
      %p114 = pneg %p113
      // Predicated region
      $region9: #{tpu_custom_call.1} parent=5 // pred_check
        _
      $region10: #{tpu_custom_call.1} parent=5 // pred_check_branch
        %116 = sbr.rel (%p113) target = $region12
      $region11: #{tpu_custom_call.1} parent=5 // pred_region
        %s117 = ssub.s32 %s13, 1
        // Predicated region
        $region13: #{tpu_custom_call.1} parent=11 // pred_check
          %p118 = pneg %p51
        $region14: #{tpu_custom_call.1} parent=11 // pred_check_branch
          %120 = sbr.rel (%p118) target = $region16
        $region15: #{tpu_custom_call.1} parent=11 // pred_region
          %s121 = smul.u32 16, %s22
          %s123 = ssub.s32 4096, 4096
          %124 = vsyncadd [#allocation8], %s123
          %s125 = smul.addr %s121, 2
          %s126 = smul.addr %s125, 128
          %s127 = scalar_lea.hbm %s0, %s126
          %s128 = sshll.u32 [#allocation7], 4
          %s129 = int_to_ptr.vmem [resolvable:$true] %s128
          %134 = dma.hbm_to_vmem [thread:$0]  %s127, 4096, %s129, [#allocation8], 256, 256, 16
        $region16: #{tpu_custom_call.1} parent=11 // pred_fallthru
          _
      $region12: #{tpu_custom_call.1} parent=5 // pred_fallthru
        _
      %p135 = scmp.lt.s32.totalorder %s13, 4
      // Predicated region
      $region17: #{tpu_custom_call.1} parent=5 // pred_check
        %p136 = pneg %p135
      $region18: #{tpu_custom_call.1} parent=5 // pred_check_branch
        %138 = sbr.rel (%p136) target = $region20
      $region19: #{tpu_custom_call.1} parent=5 // pred_region
        // Predicated region
        $region21: #{tpu_custom_call.1} parent=19 // pred_check
          %p139 = pneg %p71
        $region22: #{tpu_custom_call.1} parent=19 // pred_check_branch
          %141 = sbr.rel (%p139) target = $region24
        $region23: #{tpu_custom_call.1} parent=19 // pred_region
          %s142 = sand.u32 %s61, 1
          %s143 = scalar_lea.sflag [#allocation11], %s142
          %s144 = sand.u32 %s61, 1
          %s145 = smul.addr %s144, 256
          %s146 = scalar_lea.vmem [#allocation10], %s145
          %s147 = smul.u32 16, %s21
          %s149 = ssub.s32 4096, 4096
          %150 = vsyncadd %s143, %s149
          %s151 = smul.addr %s147, 2
          %s152 = smul.addr %s151, 128
          %s153 = scalar_lea.hbm %s1, %s152
          %s154 = sshll.u32 %s146, 4
          %s155 = int_to_ptr.vmem [resolvable:$true] %s154
          %160 = dma.hbm_to_vmem [thread:$0]  %s153, 4096, %s155, %s143, 256, 256, 16
        $region24: #{tpu_custom_call.1} parent=19 // pred_fallthru
          _
      $region20: #{tpu_custom_call.1} parent=5 // pred_fallthru
        _
      %p161 = scmp.le.s32.totalorder 1, %s13
      %p162 = scmp.lt.s32.totalorder %s13, 5
      %p163 = pnand %p161, %p162
      %p164 = pneg %p163
      // Predicated region
      $region25: #{tpu_custom_call.1} parent=5 // pred_check
        _
      $region26: #{tpu_custom_call.1} parent=5 // pred_check_branch
        %166 = sbr.rel (%p163) target = $region28
      $region27: #{tpu_custom_call.1} parent=5 // pred_region
        %s167 = ssub.s32 %s13, 1
        // Predicated region
        $region29: #{tpu_custom_call.1} parent=27 // pred_check
          %p168 = pneg %p51
        $region30: #{tpu_custom_call.1} parent=27 // pred_check_branch
          %170 = sbr.rel (%p168) target = $region32
        $region31: #{tpu_custom_call.1} parent=27 // pred_region
          %171 = dma.done [#allocation8], 4096
        $region32: #{tpu_custom_call.1} parent=27 // pred_fallthru
          _
        %s172 = sand.u32 %s64, 1
        %s173 = scalar_lea.sflag [#allocation11], %s172
        %s174 = sand.u32 %s64, 1
        %s175 = smul.addr %s174, 256
        %s176 = scalar_lea.vmem [#allocation10], %s175
        // Predicated region
        $region33: #{tpu_custom_call.1} parent=27 // pred_check
          %p177 = pneg %p77
        $region34: #{tpu_custom_call.1} parent=27 // pred_check_branch
          %179 = sbr.rel (%p177) target = $region36
        $region35: #{tpu_custom_call.1} parent=27 // pred_region
          %180 = dma.done %s173, 4096
        $region36: #{tpu_custom_call.1} parent=27 // pred_fallthru
          _
        %p181 = pneg %p51
        %p182 = pneg %p48
        %s183 = sand.u32 %s64, 1
        %s184 = scalar_lea.sflag [#allocation11], %s183
        %s185 = sand.u32 %s64, 1
        %s186 = smul.addr %s185, 256
        %s187 = scalar_lea.vmem [#allocation10], %s186
        %p188 = pneg %p77
        %p189 = pneg %p74
        %p190 = pneg %p103
        %p191 = pneg %p100
        %s192 = smul.u32 16, %s22
        %s193 = smul.u32 16, %s23
        %p194 = scmp.eq.s32.totalorder %s23, 0
        // Predicated region
        $region37: #{tpu_custom_call.1} parent=27 // pred_check
          %p195 = pneg %p194
        $region38: #{tpu_custom_call.1} parent=27 // pred_check_branch
          %197 = sbr.rel (%p195) target = $region40
        $region39: #{tpu_custom_call.1} parent=27 // pred_region
          %v198 = vld [vmem:[#allocation7] sm:$0xff]
          %v199 = vld [vmem:[#allocation7 + $0x8] sm:$0xff]
          %v200 = vld [vmem:[#allocation7 + $0x10] sm:$0xff]
          %v201 = vld [vmem:[#allocation7 + $0x18] sm:$0xff]
          %v202 = vld [vmem:[#allocation7 + $0x20] sm:$0xff]
          %v203 = vld [vmem:[#allocation7 + $0x28] sm:$0xff]
          %v204 = vld [vmem:[#allocation7 + $0x30] sm:$0xff]
          %v205 = vld [vmem:[#allocation7 + $0x38] sm:$0xff]
          %v206 = vld [vmem:[#allocation7 + $0x40] sm:$0xff]
          %v207 = vld [vmem:[#allocation7 + $0x48] sm:$0xff]
          %v208 = vld [vmem:[#allocation7 + $0x50] sm:$0xff]
          %v209 = vld [vmem:[#allocation7 + $0x58] sm:$0xff]
          %v210 = vld [vmem:[#allocation7 + $0x60] sm:$0xff]
          %v211 = vld [vmem:[#allocation7 + $0x68] sm:$0xff]
          %v212 = vld [vmem:[#allocation7 + $0x70] sm:$0xff]
          %v213 = vld [vmem:[#allocation7 + $0x78] sm:$0xff]
          %v214 = vld [vmem:[#allocation7 + $0x80] sm:$0xff]
          %v215 = vld [vmem:[#allocation7 + $0x88] sm:$0xff]
          %v216 = vld [vmem:[#allocation7 + $0x90] sm:$0xff]
          %v217 = vld [vmem:[#allocation7 + $0x98] sm:$0xff]
          %v218 = vld [vmem:[#allocation7 + $0xa0] sm:$0xff]
          %v219 = vld [vmem:[#allocation7 + $0xa8] sm:$0xff]
          %v220 = vld [vmem:[#allocation7 + $0xb0] sm:$0xff]
          %v221 = vld [vmem:[#allocation7 + $0xb8] sm:$0xff]
          %v222 = vld [vmem:[#allocation7 + $0xc0] sm:$0xff]
          %v223 = vld [vmem:[#allocation7 + $0xc8] sm:$0xff]
          %v224 = vld [vmem:[#allocation7 + $0xd0] sm:$0xff]
          %v225 = vld [vmem:[#allocation7 + $0xd8] sm:$0xff]
          %v226 = vld [vmem:[#allocation7 + $0xe0] sm:$0xff]
          %v227 = vld [vmem:[#allocation7 + $0xe8] sm:$0xff]
          %v228 = vld [vmem:[#allocation7 + $0xf0] sm:$0xff]
          %v229 = vld [vmem:[#allocation7 + $0xf8] sm:$0xff]
          %v230 = vmul.f32 %v198, %v198
          %v231 = vmul.f32 %v199, %v199
          %v232 = vmul.f32 %v200, %v200
          %v233 = vmul.f32 %v201, %v201
          %v234 = vmul.f32 %v202, %v202
          %v235 = vmul.f32 %v203, %v203
          %v236 = vmul.f32 %v204, %v204
          %v237 = vmul.f32 %v205, %v205
          %v238 = vmul.f32 %v206, %v206
          %v239 = vmul.f32 %v207, %v207
          %v240 = vmul.f32 %v208, %v208
          %v241 = vmul.f32 %v209, %v209
          %v242 = vmul.f32 %v210, %v210
          %v243 = vmul.f32 %v211, %v211
          %v244 = vmul.f32 %v212, %v212
          %v245 = vmul.f32 %v213, %v213
          %v246 = vmul.f32 %v214, %v214
          %v247 = vmul.f32 %v215, %v215
          %v248 = vmul.f32 %v216, %v216
          %v249 = vmul.f32 %v217, %v217
          %v250 = vmul.f32 %v218, %v218
          %v251 = vmul.f32 %v219, %v219
          %v252 = vmul.f32 %v220, %v220
          %v253 = vmul.f32 %v221, %v221
          %v254 = vmul.f32 %v222, %v222
          %v255 = vmul.f32 %v223, %v223
          %v256 = vmul.f32 %v224, %v224
          %v257 = vmul.f32 %v225, %v225
          %v258 = vmul.f32 %v226, %v226
          %v259 = vmul.f32 %v227, %v227
          %v260 = vmul.f32 %v228, %v228
          %v261 = vmul.f32 %v229, %v229
          %v262 = vadd.f32 %v230, %v231
          %263 = vadd.xlane.f32.xlu0 %v262
          %v264 = vpop.xlane.xlu0 %263
          %v265 = vadd.f32 %v232, %v233
          %266 = vadd.xlane.f32.xlu0 %v265
          %v267 = vpop.xlane.xlu0 %266
          %v268 = vadd.f32 %v234, %v235
          %269 = vadd.xlane.f32.xlu0 %v268
          %v270 = vpop.xlane.xlu0 %269
          %v271 = vadd.f32 %v236, %v237
          %272 = vadd.xlane.f32.xlu0 %v271
          %v273 = vpop.xlane.xlu0 %272
          %v274 = vadd.f32 %v238, %v239
          %275 = vadd.xlane.f32.xlu0 %v274
          %v276 = vpop.xlane.xlu0 %275
          %v277 = vadd.f32 %v240, %v241
          %278 = vadd.xlane.f32.xlu0 %v277
          %v279 = vpop.xlane.xlu0 %278
          %v280 = vadd.f32 %v242, %v243
          %281 = vadd.xlane.f32.xlu0 %v280
          %v282 = vpop.xlane.xlu0 %281
          %v283 = vadd.f32 %v244, %v245
          %284 = vadd.xlane.f32.xlu0 %v283
          %v285 = vpop.xlane.xlu0 %284
          %v286 = vadd.f32 %v246, %v247
          %287 = vadd.xlane.f32.xlu0 %v286
          %v288 = vpop.xlane.xlu0 %287
          %v289 = vadd.f32 %v248, %v249
          %290 = vadd.xlane.f32.xlu0 %v289
          %v291 = vpop.xlane.xlu0 %290
          %v292 = vadd.f32 %v250, %v251
          %293 = vadd.xlane.f32.xlu0 %v292
          %v294 = vpop.xlane.xlu0 %293
          %v295 = vadd.f32 %v252, %v253
          %296 = vadd.xlane.f32.xlu0 %v295
          %v297 = vpop.xlane.xlu0 %296
          %v298 = vadd.f32 %v254, %v255
          %299 = vadd.xlane.f32.xlu0 %v298
          %v300 = vpop.xlane.xlu0 %299
          %v301 = vadd.f32 %v256, %v257
          %302 = vadd.xlane.f32.xlu0 %v301
          %v303 = vpop.xlane.xlu0 %302
          %v304 = vadd.f32 %v258, %v259
          %305 = vadd.xlane.f32.xlu0 %v304
          %v306 = vpop.xlane.xlu0 %305
          %v307 = vadd.f32 %v260, %v261
          %308 = vadd.xlane.f32.xlu0 %v307
          %v309 = vpop.xlane.xlu0 %308
          %v310 = vmax.f32 %v264, 1e-24
          %v311 = vmax.f32 %v267, 1e-24
          %v312 = vmax.f32 %v270, 1e-24
          %v313 = vmax.f32 %v273, 1e-24
          %v314 = vmax.f32 %v276, 1e-24
          %v315 = vmax.f32 %v279, 1e-24
          %v316 = vmax.f32 %v282, 1e-24
          %v317 = vmax.f32 %v285, 1e-24
          %v318 = vmax.f32 %v288, 1e-24
          %v319 = vmax.f32 %v291, 1e-24
          %v320 = vmax.f32 %v294, 1e-24
          %v321 = vmax.f32 %v297, 1e-24
          %v322 = vmax.f32 %v300, 1e-24
          %v323 = vmax.f32 %v303, 1e-24
          %v324 = vmax.f32 %v306, 1e-24
          %v325 = vmax.f32 %v309, 1e-24
          %v326 = vrsqrt.pop %v310
          %v327 = vrsqrt.pop %v311
          %v328 = vrsqrt.pop %v312
          %v329 = vrsqrt.pop %v313
          %v330 = vrsqrt.pop %v314
          %v331 = vrsqrt.pop %v315
          %v332 = vrsqrt.pop %v316
          %v333 = vrsqrt.pop %v317
          %v334 = vrsqrt.pop %v318
          %v335 = vrsqrt.pop %v319
          %v336 = vrsqrt.pop %v320
          %v337 = vrsqrt.pop %v321
          %v338 = vrsqrt.pop %v322
          %v339 = vrsqrt.pop %v323
          %v340 = vrsqrt.pop %v324
          %v341 = vrsqrt.pop %v325
          %v342 = vmul.f32 %v198, %v326
          %v343 = vmul.f32 %v199, %v326
          %v344 = vmul.f32 %v200, %v327
          %v345 = vmul.f32 %v201, %v327
          %v346 = vmul.f32 %v202, %v328
          %v347 = vmul.f32 %v203, %v328
          %v348 = vmul.f32 %v204, %v329
          %v349 = vmul.f32 %v205, %v329
          %v350 = vmul.f32 %v206, %v330
          %v351 = vmul.f32 %v207, %v330
          %v352 = vmul.f32 %v208, %v331
          %v353 = vmul.f32 %v209, %v331
          %v354 = vmul.f32 %v210, %v332
          %v355 = vmul.f32 %v211, %v332
          %v356 = vmul.f32 %v212, %v333
          %v357 = vmul.f32 %v213, %v333
          %v358 = vmul.f32 %v214, %v334
          %v359 = vmul.f32 %v215, %v334
          %v360 = vmul.f32 %v216, %v335
          %v361 = vmul.f32 %v217, %v335
          %v362 = vmul.f32 %v218, %v336
          %v363 = vmul.f32 %v219, %v336
          %v364 = vmul.f32 %v220, %v337
          %v365 = vmul.f32 %v221, %v337
          %v366 = vmul.f32 %v222, %v338
          %v367 = vmul.f32 %v223, %v338
          %v368 = vmul.f32 %v224, %v339
          %v369 = vmul.f32 %v225, %v339
          %v370 = vmul.f32 %v226, %v340
          %v371 = vmul.f32 %v227, %v340
          %v372 = vmul.f32 %v228, %v341
          %v373 = vmul.f32 %v229, %v341
          %374 = vst [vmem:[#allocation2] sm:$0xff] %v342
          %375 = vst [vmem:[#allocation2 + $0x8] sm:$0xff] %v343
          %376 = vst [vmem:[#allocation2 + $0x10] sm:$0xff] %v344
          %377 = vst [vmem:[#allocation2 + $0x18] sm:$0xff] %v345
          %378 = vst [vmem:[#allocation2 + $0x20] sm:$0xff] %v346
          %379 = vst [vmem:[#allocation2 + $0x28] sm:$0xff] %v347
          %380 = vst [vmem:[#allocation2 + $0x30] sm:$0xff] %v348
          %381 = vst [vmem:[#allocation2 + $0x38] sm:$0xff] %v349
          %382 = vst [vmem:[#allocation2 + $0x40] sm:$0xff] %v350
          %383 = vst [vmem:[#allocation2 + $0x48] sm:$0xff] %v351
          %384 = vst [vmem:[#allocation2 + $0x50] sm:$0xff] %v352
          %385 = vst [vmem:[#allocation2 + $0x58] sm:$0xff] %v353
          %386 = vst [vmem:[#allocation2 + $0x60] sm:$0xff] %v354
          %387 = vst [vmem:[#allocation2 + $0x68] sm:$0xff] %v355
          %388 = vst [vmem:[#allocation2 + $0x70] sm:$0xff] %v356
          %389 = vst [vmem:[#allocation2 + $0x78] sm:$0xff] %v357
          %390 = vst [vmem:[#allocation2 + $0x80] sm:$0xff] %v358
          %391 = vst [vmem:[#allocation2 + $0x88] sm:$0xff] %v359
          %392 = vst [vmem:[#allocation2 + $0x90] sm:$0xff] %v360
          %393 = vst [vmem:[#allocation2 + $0x98] sm:$0xff] %v361
          %394 = vst [vmem:[#allocation2 + $0xa0] sm:$0xff] %v362
          %395 = vst [vmem:[#allocation2 + $0xa8] sm:$0xff] %v363
          %396 = vst [vmem:[#allocation2 + $0xb0] sm:$0xff] %v364
          %397 = vst [vmem:[#allocation2 + $0xb8] sm:$0xff] %v365
          %398 = vst [vmem:[#allocation2 + $0xc0] sm:$0xff] %v366
          %399 = vst [vmem:[#allocation2 + $0xc8] sm:$0xff] %v367
          %400 = vst [vmem:[#allocation2 + $0xd0] sm:$0xff] %v368
          %401 = vst [vmem:[#allocation2 + $0xd8] sm:$0xff] %v369
          %402 = vst [vmem:[#allocation2 + $0xe0] sm:$0xff] %v370
          %403 = vst [vmem:[#allocation2 + $0xe8] sm:$0xff] %v371
          %404 = vst [vmem:[#allocation2 + $0xf0] sm:$0xff] %v372
          %405 = vst [vmem:[#allocation2 + $0xf8] sm:$0xff] %v373
          %406 = vst [vmem:[#allocation3] sm:$0x1] 4.0
          %407 = vst [vmem:[#allocation5] sm:$0x1] 2.0
          %408 = vst [vmem:[#allocation4] sm:$0x1] 0.0
          %409 = vst [vmem:[#allocation6] sm:$0x1] 0.0
        $region40: #{tpu_custom_call.1} parent=27 // pred_fallthru
          _
        %v410 = vld [vmem:[%s176] sm:$0xff]
        %v411 = vld [vmem:[%s176 + $0x8] sm:$0xff]
        %v412 = vld [vmem:[%s176 + $0x10] sm:$0xff]
        %v413 = vld [vmem:[%s176 + $0x18] sm:$0xff]
        %v414 = vld [vmem:[%s176 + $0x20] sm:$0xff]
        %v415 = vld [vmem:[%s176 + $0x28] sm:$0xff]
        %v416 = vld [vmem:[%s176 + $0x30] sm:$0xff]
        %v417 = vld [vmem:[%s176 + $0x38] sm:$0xff]
        %v418 = vld [vmem:[%s176 + $0x40] sm:$0xff]
        %v419 = vld [vmem:[%s176 + $0x48] sm:$0xff]
        %v420 = vld [vmem:[%s176 + $0x50] sm:$0xff]
        %v421 = vld [vmem:[%s176 + $0x58] sm:$0xff]
        %v422 = vld [vmem:[%s176 + $0x60] sm:$0xff]
        %v423 = vld [vmem:[%s176 + $0x68] sm:$0xff]
        %v424 = vld [vmem:[%s176 + $0x70] sm:$0xff]
        %v425 = vld [vmem:[%s176 + $0x78] sm:$0xff]
        %v426 = vld [vmem:[%s176 + $0x80] sm:$0xff]
        %v427 = vld [vmem:[%s176 + $0x88] sm:$0xff]
        %v428 = vld [vmem:[%s176 + $0x90] sm:$0xff]
        %v429 = vld [vmem:[%s176 + $0x98] sm:$0xff]
        %v430 = vld [vmem:[%s176 + $0xa0] sm:$0xff]
        %v431 = vld [vmem:[%s176 + $0xa8] sm:$0xff]
        %v432 = vld [vmem:[%s176 + $0xb0] sm:$0xff]
        %v433 = vld [vmem:[%s176 + $0xb8] sm:$0xff]
        %v434 = vld [vmem:[%s176 + $0xc0] sm:$0xff]
        %v435 = vld [vmem:[%s176 + $0xc8] sm:$0xff]
        %v436 = vld [vmem:[%s176 + $0xd0] sm:$0xff]
        %v437 = vld [vmem:[%s176 + $0xd8] sm:$0xff]
        %v438 = vld [vmem:[%s176 + $0xe0] sm:$0xff]
        %v439 = vld [vmem:[%s176 + $0xe8] sm:$0xff]
        %v440 = vld [vmem:[%s176 + $0xf0] sm:$0xff]
        %v441 = vld [vmem:[%s176 + $0xf8] sm:$0xff]
        %v442 = vld [vmem:[#allocation2] sm:$0xff]
        %v443 = vld [vmem:[#allocation2 + $0x8] sm:$0xff]
        %v444 = vld [vmem:[#allocation2 + $0x10] sm:$0xff]
        %v445 = vld [vmem:[#allocation2 + $0x18] sm:$0xff]
        %v446 = vld [vmem:[#allocation2 + $0x20] sm:$0xff]
        %v447 = vld [vmem:[#allocation2 + $0x28] sm:$0xff]
        %v448 = vld [vmem:[#allocation2 + $0x30] sm:$0xff]
        %v449 = vld [vmem:[#allocation2 + $0x38] sm:$0xff]
        %v450 = vld [vmem:[#allocation2 + $0x40] sm:$0xff]
        %v451 = vld [vmem:[#allocation2 + $0x48] sm:$0xff]
        %v452 = vld [vmem:[#allocation2 + $0x50] sm:$0xff]
        %v453 = vld [vmem:[#allocation2 + $0x58] sm:$0xff]
        %v454 = vld [vmem:[#allocation2 + $0x60] sm:$0xff]
        %v455 = vld [vmem:[#allocation2 + $0x68] sm:$0xff]
        %v456 = vld [vmem:[#allocation2 + $0x70] sm:$0xff]
        %v457 = vld [vmem:[#allocation2 + $0x78] sm:$0xff]
        %v458 = vld [vmem:[#allocation2 + $0x80] sm:$0xff]
        %v459 = vld [vmem:[#allocation2 + $0x88] sm:$0xff]
        %v460 = vld [vmem:[#allocation2 + $0x90] sm:$0xff]
        %v461 = vld [vmem:[#allocation2 + $0x98] sm:$0xff]
        %v462 = vld [vmem:[#allocation2 + $0xa0] sm:$0xff]
        %v463 = vld [vmem:[#allocation2 + $0xa8] sm:$0xff]
        %v464 = vld [vmem:[#allocation2 + $0xb0] sm:$0xff]
        %v465 = vld [vmem:[#allocation2 + $0xb8] sm:$0xff]
        %v466 = vld [vmem:[#allocation2 + $0xc0] sm:$0xff]
        %v467 = vld [vmem:[#allocation2 + $0xc8] sm:$0xff]
        %v468 = vld [vmem:[#allocation2 + $0xd0] sm:$0xff]
        %v469 = vld [vmem:[#allocation2 + $0xd8] sm:$0xff]
        %v470 = vld [vmem:[#allocation2 + $0xe0] sm:$0xff]
        %v471 = vld [vmem:[#allocation2 + $0xe8] sm:$0xff]
        %v472 = vld [vmem:[#allocation2 + $0xf0] sm:$0xff]
        %v473 = vld [vmem:[#allocation2 + $0xf8] sm:$0xff]
        %474 = vmatprep.subr.mxu0 %v443
        %475 = vmatpush1.xpose.msra.mxu0 %v442
        %476 = vmatprep.subr.mxu0 %v445
        %477 = vmatpush1.xpose.msra.mxu0 %v444
        %478 = vmatprep.subr.mxu0 %v447
        %479 = vmatpush1.xpose.msra.mxu0 %v446
        %480 = vmatprep.subr.mxu0 %v449
        %481 = vmatpush1.xpose.msra.mxu0 %v448
        %482 = vmatprep.subr.mxu0 %v451
        %483 = vmatpush1.xpose.msra.mxu0 %v450
        %484 = vmatprep.subr.mxu0 %v453
        %485 = vmatpush1.xpose.msra.mxu0 %v452
        %486 = vmatprep.subr.mxu0 %v455
        %487 = vmatpush1.xpose.msra.mxu0 %v454
        %488 = vmatprep.subr.mxu0 %v457
        %489 = vmatpush1.xpose.msra.mxu0 %v456
        %490 = vmatprep.subr.mxu0 %v459
        %491 = vmatpush1.xpose.msra.mxu0 %v458
        %492 = vmatprep.subr.mxu0 %v461
        %493 = vmatpush1.xpose.msra.mxu0 %v460
        %494 = vmatprep.subr.mxu0 %v463
        %495 = vmatpush1.xpose.msra.mxu0 %v462
        %496 = vmatprep.subr.mxu0 %v465
        %497 = vmatpush1.xpose.msra.mxu0 %v464
        %498 = vmatprep.subr.mxu0 %v467
        %499 = vmatpush1.xpose.msra.mxu0 %v466
        %500 = vmatprep.subr.mxu0 %v469
        %501 = vmatpush1.xpose.msra.mxu0 %v468
        %502 = vmatprep.subr.mxu0 %v471
        %503 = vmatpush1.xpose.msra.mxu0 %v470
        %504 = vmatprep.subr.mxu0 %v473
        %505 = vmatpush1.xpose.msra.mxu0 %v472
        %506 = vmatprep.subr.mxu0 0.0
        %507 = vmatpush1.xpose.msra.mxu0 0.0
        %508 = vmatprep.subr.mxu0 0.0
        %509 = vmatpush1.xpose.msra.mxu0 0.0
        %510 = vmatprep.subr.mxu0 0.0
        %511 = vmatpush1.xpose.msra.mxu0 0.0
        %512 = vmatprep.subr.mxu0 0.0
        %513 = vmatpush1.xpose.msra.mxu0 0.0
        %514 = vmatprep.subr.mxu0 0.0
        %515 = vmatpush1.xpose.msra.mxu0 0.0
        %516 = vmatprep.subr.mxu0 0.0
        %517 = vmatpush1.xpose.msra.mxu0 0.0
        %518 = vmatprep.subr.mxu0 0.0
        %519 = vmatpush1.xpose.msra.mxu0 0.0
        %520 = vmatprep.subr.mxu0 0.0
        %521 = vmatpush1.xpose.msra.mxu0 0.0
        %522 = vmatprep.subr.mxu0 0.0
        %523 = vmatpush1.xpose.msra.mxu0 0.0
        %524 = vmatprep.subr.mxu0 0.0
        %525 = vmatpush1.xpose.msra.mxu0 0.0
        %526 = vmatprep.subr.mxu0 0.0
        %527 = vmatpush1.xpose.msra.mxu0 0.0
        %528 = vmatprep.subr.mxu0 0.0
        %529 = vmatpush1.xpose.msra.mxu0 0.0
        %530 = vmatprep.subr.mxu0 0.0
        %531 = vmatpush1.xpose.msra.mxu0 0.0
        %532 = vmatprep.subr.mxu0 0.0
        %533 = vmatpush1.xpose.msra.mxu0 0.0
        %534 = vmatprep.subr.mxu0 0.0
        %535 = vmatpush1.xpose.msra.mxu0 0.0
        %536 = vmatprep.subr.mxu0 0.0
        %537 = vmatpush1.xpose.msra.mxu0 0.0
        %538 = vmatprep.mubr.f32.mxu0 %v411
        %539 = vmatmul.mubr.f32.gmra.mrb[0].mxu0 %v410
        %v540 = vpop.f32.mrb[0].mxu0
        %v541 = vadd.f32 0.0, %v540
        %v542 = vpop.f32.mrb[0].mxu0
        %543 = vmatprep.mubr.f32.mxu0 %v413
        %544 = vmatmul.mubr.f32.gmra.mrb[0].mxu0 %v412
        %v545 = vpop.f32.mrb[0].mxu0
        %v546 = vadd.f32 0.0, %v545
        %v547 = vpop.f32.mrb[0].mxu0
        %548 = vmatprep.mubr.f32.mxu0 %v415
        %549 = vmatmul.mubr.f32.gmra.mrb[0].mxu0 %v414
        %v550 = vpop.f32.mrb[0].mxu0
        %v551 = vadd.f32 0.0, %v550
        %v552 = vpop.f32.mrb[0].mxu0
        %553 = vmatprep.mubr.f32.mxu0 %v417
        %554 = vmatmul.mubr.f32.gmra.mrb[0].mxu0 %v416
        %v555 = vpop.f32.mrb[0].mxu0
        %v556 = vadd.f32 0.0, %v555
        %v557 = vpop.f32.mrb[0].mxu0
        %558 = vmatprep.mubr.f32.mxu0 %v419
        %559 = vmatmul.mubr.f32.gmra.mrb[0].mxu0 %v418
        %v560 = vpop.f32.mrb[0].mxu0
        %v561 = vadd.f32 0.0, %v560
        %v562 = vpop.f32.mrb[0].mxu0
        %563 = vmatprep.mubr.f32.mxu0 %v421
        %564 = vmatmul.mubr.f32.gmra.mrb[0].mxu0 %v420
        %v565 = vpop.f32.mrb[0].mxu0
        %v566 = vadd.f32 0.0, %v565
        %v567 = vpop.f32.mrb[0].mxu0
        %568 = vmatprep.mubr.f32.mxu0 %v423
        %569 = vmatmul.mubr.f32.gmra.mrb[0].mxu0 %v422
        %v570 = vpop.f32.mrb[0].mxu0
        %v571 = vadd.f32 0.0, %v570
        %v572 = vpop.f32.mrb[0].mxu0
        %573 = vmatprep.mubr.f32.mxu0 %v425
        %574 = vmatmul.mubr.f32.gmra.mrb[0].mxu0 %v424
        %v575 = vpop.f32.mrb[0].mxu0
        %v576 = vadd.f32 0.0, %v575
        %v577 = vpop.f32.mrb[0].mxu0
        %578 = vmatprep.mubr.f32.mxu0 %v427
        %579 = vmatmul.mubr.f32.gmra.mrb[0].mxu0 %v426
        %v580 = vpop.f32.mrb[0].mxu0
        %v581 = vadd.f32 0.0, %v580
        %v582 = vpop.f32.mrb[0].mxu0
        %583 = vmatprep.mubr.f32.mxu0 %v429
        %584 = vmatmul.mubr.f32.gmra.mrb[0].mxu0 %v428
        %v585 = vpop.f32.mrb[0].mxu0
        %v586 = vadd.f32 0.0, %v585
        %v587 = vpop.f32.mrb[0].mxu0
        %588 = vmatprep.mubr.f32.mxu0 %v431
        %589 = vmatmul.mubr.f32.gmra.mrb[0].mxu0 %v430
        %v590 = vpop.f32.mrb[0].mxu0
        %v591 = vadd.f32 0.0, %v590
        %v592 = vpop.f32.mrb[0].mxu0
        %593 = vmatprep.mubr.f32.mxu0 %v433
        %594 = vmatmul.mubr.f32.gmra.mrb[0].mxu0 %v432
        %v595 = vpop.f32.mrb[0].mxu0
        %v596 = vadd.f32 0.0, %v595
        %v597 = vpop.f32.mrb[0].mxu0
        %598 = vmatprep.mubr.f32.mxu0 %v435
        %599 = vmatmul.mubr.f32.gmra.mrb[0].mxu0 %v434
        %v600 = vpop.f32.mrb[0].mxu0
        %v601 = vadd.f32 0.0, %v600
        %v602 = vpop.f32.mrb[0].mxu0
        %603 = vmatprep.mubr.f32.mxu0 %v437
        %604 = vmatmul.mubr.f32.gmra.mrb[0].mxu0 %v436
        %v605 = vpop.f32.mrb[0].mxu0
        %v606 = vadd.f32 0.0, %v605
        %v607 = vpop.f32.mrb[0].mxu0
        %608 = vmatprep.mubr.f32.mxu0 %v439
        %609 = vmatmul.mubr.f32.gmra.mrb[0].mxu0 %v438
        %v610 = vpop.f32.mrb[0].mxu0
        %v611 = vadd.f32 0.0, %v610
        %v612 = vpop.f32.mrb[0].mxu0
        %613 = vmatprep.mubr.f32.mxu0 %v441
        %614 = vmatmul.mubr.f32.gmra.mrb[0].mxu0 %v440
        %v615 = vpop.f32.mrb[0].mxu0
        %v616 = vadd.f32 0.0, %v615
        %v617 = vpop.f32.mrb[0].mxu0
        %618 = vdwg.mxu0
        %p619 = scmp.eq.s32.totalorder %s23, 1
        // Predicated region
        $region41: #{tpu_custom_call.1} parent=27 // pred_check
          %p620 = pneg %p619
        $region42: #{tpu_custom_call.1} parent=27 // pred_check_branch
          %622 = sbr.rel (%p620) target = $region44
        $region43: #{tpu_custom_call.1} parent=27 // pred_region
          %s623 = smul.u32 %s23, 128
          %v624 = vlaneseq
          %v625 = vshrl.u32 %v624, 7
          %v626 = vadd.s32 %v625, 8
          %v627 = vadd.s32 %v625, 16
          %v628 = vadd.s32 %v625, 24
          %v629 = vadd.s32 %v625, 32
          %v630 = vadd.s32 %v625, 40
          %v631 = vadd.s32 %v625, 48
          %v632 = vadd.s32 %v625, 56
          %v633 = vadd.s32 %v625, 64
          %v634 = vadd.s32 %v625, 72
          %v635 = vadd.s32 %v625, 80
          %v636 = vadd.s32 %v625, 88
          %v637 = vadd.s32 %v625, 96
          %v638 = vadd.s32 %v625, 104
          %v639 = vadd.s32 %v625, 112
          %v640 = vadd.s32 %v625, 120
          %v641 = vstv %s623
          %v642 = vadd.s32 %v641, %v625
          %v643 = vadd.s32 %v641, %v626
          %v644 = vadd.s32 %v641, %v627
          %v645 = vadd.s32 %v641, %v628
          %v646 = vadd.s32 %v641, %v629
          %v647 = vadd.s32 %v641, %v630
          %v648 = vadd.s32 %v641, %v631
          %v649 = vadd.s32 %v641, %v632
          %v650 = vadd.s32 %v641, %v633
          %v651 = vadd.s32 %v641, %v634
          %v652 = vadd.s32 %v641, %v635
          %v653 = vadd.s32 %v641, %v636
          %v654 = vadd.s32 %v641, %v637
          %v655 = vadd.s32 %v641, %v638
          %v656 = vadd.s32 %v641, %v639
          %v657 = vadd.s32 %v641, %v640
          %vm658 = vcmp.lt.s32.totalorder %v642, 200
          %vm659 = vcmp.lt.s32.totalorder %v643, 200
          %vm660 = vcmp.lt.s32.totalorder %v644, 200
          %vm661 = vcmp.lt.s32.totalorder %v645, 200
          %vm662 = vcmp.lt.s32.totalorder %v646, 200
          %vm663 = vcmp.lt.s32.totalorder %v647, 200
          %vm664 = vcmp.lt.s32.totalorder %v648, 200
          %vm665 = vcmp.lt.s32.totalorder %v649, 200
          %vm666 = vcmp.lt.s32.totalorder %v650, 200
          %vm667 = vcmp.lt.s32.totalorder %v651, 200
          %vm668 = vcmp.lt.s32.totalorder %v652, 200
          %vm669 = vcmp.lt.s32.totalorder %v653, 200
          %vm670 = vcmp.lt.s32.totalorder %v654, 200
          %vm671 = vcmp.lt.s32.totalorder %v655, 200
          %vm672 = vcmp.lt.s32.totalorder %v656, 200
          %vm673 = vcmp.lt.s32.totalorder %v657, 200
          %v674 = vsel %vm658, %v541, -1e+30
          %v675 = vsel %vm659, %v546, -1e+30
          %v676 = vsel %vm660, %v551, -1e+30
          %v677 = vsel %vm661, %v556, -1e+30
          %v678 = vsel %vm662, %v561, -1e+30
          %v679 = vsel %vm663, %v566, -1e+30
          %v680 = vsel %vm664, %v571, -1e+30
          %v681 = vsel %vm665, %v576, -1e+30
          %v682 = vsel %vm666, %v581, -1e+30
          %v683 = vsel %vm667, %v586, -1e+30
          %v684 = vsel %vm668, %v591, -1e+30
          %v685 = vsel %vm669, %v596, -1e+30
          %v686 = vsel %vm670, %v601, -1e+30
          %v687 = vsel %vm671, %v606, -1e+30
          %v688 = vsel %vm672, %v611, -1e+30
          %v689 = vsel %vm673, %v616, -1e+30
          %v690 = vld [vmem:[#allocation4] sm:$0x1]
          %v691 = vsub.f32 %v674, 4.0
          %v692 = vsub.f32 %v675, 4.0
          %v693 = vsub.f32 %v676, 4.0
          %v694 = vsub.f32 %v677, 4.0
          %v695 = vsub.f32 %v678, 4.0
          %v696 = vsub.f32 %v679, 4.0
          %v697 = vsub.f32 %v680, 4.0
          %v698 = vsub.f32 %v681, 4.0
          %v699 = vsub.f32 %v682, 4.0
          %v700 = vsub.f32 %v683, 4.0
          %v701 = vsub.f32 %v684, 4.0
          %v702 = vsub.f32 %v685, 4.0
          %v703 = vsub.f32 %v686, 4.0
          %v704 = vsub.f32 %v687, 4.0
          %v705 = vsub.f32 %v688, 4.0
          %v706 = vsub.f32 %v689, 4.0
          %v707 = vmul.f32 %v691, 1.442695
          %v708 = vpow.pop %v707
          %v709 = vmul.f32 %v692, 1.442695
          %v710 = vpow.pop %v709
          %v711 = vmul.f32 %v693, 1.442695
          %v712 = vpow.pop %v711
          %v713 = vmul.f32 %v694, 1.442695
          %v714 = vpow.pop %v713
          %v715 = vmul.f32 %v695, 1.442695
          %v716 = vpow.pop %v715
          %v717 = vmul.f32 %v696, 1.442695
          %v718 = vpow.pop %v717
          %v719 = vmul.f32 %v697, 1.442695
          %v720 = vpow.pop %v719
          %v721 = vmul.f32 %v698, 1.442695
          %v722 = vpow.pop %v721
          %v723 = vmul.f32 %v699, 1.442695
          %v724 = vpow.pop %v723
          %v725 = vmul.f32 %v700, 1.442695
          %v726 = vpow.pop %v725
          %v727 = vmul.f32 %v701, 1.442695
          %v728 = vpow.pop %v727
          %v729 = vmul.f32 %v702, 1.442695
          %v730 = vpow.pop %v729
          %v731 = vmul.f32 %v703, 1.442695
          %v732 = vpow.pop %v731
          %v733 = vmul.f32 %v704, 1.442695
          %v734 = vpow.pop %v733
          %v735 = vmul.f32 %v705, 1.442695
          %v736 = vpow.pop %v735
          %v737 = vmul.f32 %v706, 1.442695
          %v738 = vpow.pop %v737
          %v739 = vadd.f32 %v708, %v710
          %v740 = vadd.f32 %v739, %v712
          %v741 = vadd.f32 %v740, %v714
          %v742 = vadd.f32 %v741, %v716
          %v743 = vadd.f32 %v742, %v718
          %v744 = vadd.f32 %v743, %v720
          %v745 = vadd.f32 %v744, %v722
          %v746 = vadd.f32 %v745, %v724
          %v747 = vadd.f32 %v746, %v726
          %v748 = vadd.f32 %v747, %v728
          %v749 = vadd.f32 %v748, %v730
          %v750 = vadd.f32 %v749, %v732
          %v751 = vadd.f32 %v750, %v734
          %v752 = vadd.f32 %v751, %v736
          %v753 = vadd.f32 %v752, %v738
          %v754 = vrot.slane %v753, 4
          %v755 = vadd.f32 %v753, %v754
          %v756 = vrot.slane %v755, 2
          %v757 = vadd.f32 %v755, %v756
          %v758 = vrot.slane %v757, 1
          %v759 = vadd.f32 %v757, %v758
          %v760 = vadd.f32 %v690, %v759
          %761 = vst [vmem:[#allocation4] sm:$0x1] %v760
        $region44: #{tpu_custom_call.1} parent=27 // pred_fallthru
          _
        %p762 = scmp.lt.s32.totalorder %s23, 2
        %p763 = scmp.ne.s32.totalorder %s23, 1
        %p764 = pnand %p762, %p763
        %p765 = pneg %p764
        // Predicated region
        $region45: #{tpu_custom_call.1} parent=27 // pred_check
          _
        $region46: #{tpu_custom_call.1} parent=27 // pred_check_branch
          %767 = sbr.rel (%p764) target = $region48
        $region47: #{tpu_custom_call.1} parent=27 // pred_region
          %v768 = vld [vmem:[#allocation4] sm:$0x1]
          %v769 = vsub.f32 %v541, 4.0
          %v770 = vsub.f32 %v546, 4.0
          %v771 = vsub.f32 %v551, 4.0
          %v772 = vsub.f32 %v556, 4.0
          %v773 = vsub.f32 %v561, 4.0
          %v774 = vsub.f32 %v566, 4.0
          %v775 = vsub.f32 %v571, 4.0
          %v776 = vsub.f32 %v576, 4.0
          %v777 = vsub.f32 %v581, 4.0
          %v778 = vsub.f32 %v586, 4.0
          %v779 = vsub.f32 %v591, 4.0
          %v780 = vsub.f32 %v596, 4.0
          %v781 = vsub.f32 %v601, 4.0
          %v782 = vsub.f32 %v606, 4.0
          %v783 = vsub.f32 %v611, 4.0
          %v784 = vsub.f32 %v616, 4.0
          %v785 = vmul.f32 %v769, 1.442695
          %v786 = vpow.pop %v785
          %v787 = vmul.f32 %v770, 1.442695
          %v788 = vpow.pop %v787
          %v789 = vmul.f32 %v771, 1.442695
          %v790 = vpow.pop %v789
          %v791 = vmul.f32 %v772, 1.442695
          %v792 = vpow.pop %v791
          %v793 = vmul.f32 %v773, 1.442695
          %v794 = vpow.pop %v793
          %v795 = vmul.f32 %v774, 1.442695
          %v796 = vpow.pop %v795
          %v797 = vmul.f32 %v775, 1.442695
          %v798 = vpow.pop %v797
          %v799 = vmul.f32 %v776, 1.442695
          %v800 = vpow.pop %v799
          %v801 = vmul.f32 %v777, 1.442695
          %v802 = vpow.pop %v801
          %v803 = vmul.f32 %v778, 1.442695
          %v804 = vpow.pop %v803
          %v805 = vmul.f32 %v779, 1.442695
          %v806 = vpow.pop %v805
          %v807 = vmul.f32 %v780, 1.442695
          %v808 = vpow.pop %v807
          %v809 = vmul.f32 %v781, 1.442695
          %v810 = vpow.pop %v809
          %v811 = vmul.f32 %v782, 1.442695
          %v812 = vpow.pop %v811
          %v813 = vmul.f32 %v783, 1.442695
          %v814 = vpow.pop %v813
          %v815 = vmul.f32 %v784, 1.442695
          %v816 = vpow.pop %v815
          %v817 = vadd.f32 %v786, %v788
          %v818 = vadd.f32 %v817, %v790
          %v819 = vadd.f32 %v818, %v792
          %v820 = vadd.f32 %v819, %v794
          %v821 = vadd.f32 %v820, %v796
          %v822 = vadd.f32 %v821, %v798
          %v823 = vadd.f32 %v822, %v800
          %v824 = vadd.f32 %v823, %v802
          %v825 = vadd.f32 %v824, %v804
          %v826 = vadd.f32 %v825, %v806
          %v827 = vadd.f32 %v826, %v808
          %v828 = vadd.f32 %v827, %v810
          %v829 = vadd.f32 %v828, %v812
          %v830 = vadd.f32 %v829, %v814
          %v831 = vadd.f32 %v830, %v816
          %v832 = vrot.slane %v831, 4
          %v833 = vadd.f32 %v831, %v832
          %v834 = vrot.slane %v833, 2
          %v835 = vadd.f32 %v833, %v834
          %v836 = vrot.slane %v835, 1
          %v837 = vadd.f32 %v835, %v836
          %v838 = vadd.f32 %v768, %v837
          %839 = vst [vmem:[#allocation4] sm:$0x1] %v838
        $region48: #{tpu_custom_call.1} parent=27 // pred_fallthru
          _
        %p840 = scmp.eq.s32.totalorder %s23, 3
        // Predicated region
        $region49: #{tpu_custom_call.1} parent=27 // pred_check
          %p841 = pneg %p840
        $region50: #{tpu_custom_call.1} parent=27 // pred_check_branch
          %843 = sbr.rel (%p841) target = $region52
        $region51: #{tpu_custom_call.1} parent=27 // pred_region
          %s844 = ssub.s32 %s23, 2
          %s845 = smul.u32 %s844, 128
          %v846 = vlaneseq
          %v847 = vshrl.u32 %v846, 7
          %v848 = vadd.s32 %v847, 8
          %v849 = vadd.s32 %v847, 16
          %v850 = vadd.s32 %v847, 24
          %v851 = vadd.s32 %v847, 32
          %v852 = vadd.s32 %v847, 40
          %v853 = vadd.s32 %v847, 48
          %v854 = vadd.s32 %v847, 56
          %v855 = vadd.s32 %v847, 64
          %v856 = vadd.s32 %v847, 72
          %v857 = vadd.s32 %v847, 80
          %v858 = vadd.s32 %v847, 88
          %v859 = vadd.s32 %v847, 96
          %v860 = vadd.s32 %v847, 104
          %v861 = vadd.s32 %v847, 112
          %v862 = vadd.s32 %v847, 120
          %v863 = vstv %s845
          %v864 = vadd.s32 %v863, %v847
          %v865 = vadd.s32 %v863, %v848
          %v866 = vadd.s32 %v863, %v849
          %v867 = vadd.s32 %v863, %v850
          %v868 = vadd.s32 %v863, %v851
          %v869 = vadd.s32 %v863, %v852
          %v870 = vadd.s32 %v863, %v853
          %v871 = vadd.s32 %v863, %v854
          %v872 = vadd.s32 %v863, %v855
          %v873 = vadd.s32 %v863, %v856
          %v874 = vadd.s32 %v863, %v857
          %v875 = vadd.s32 %v863, %v858
          %v876 = vadd.s32 %v863, %v859
          %v877 = vadd.s32 %v863, %v860
          %v878 = vadd.s32 %v863, %v861
          %v879 = vadd.s32 %v863, %v862
          %vm880 = vcmp.lt.s32.totalorder %v864, 136
          %vm881 = vcmp.lt.s32.totalorder %v865, 136
          %vm882 = vcmp.lt.s32.totalorder %v866, 136
          %vm883 = vcmp.lt.s32.totalorder %v867, 136
          %vm884 = vcmp.lt.s32.totalorder %v868, 136
          %vm885 = vcmp.lt.s32.totalorder %v869, 136
          %vm886 = vcmp.lt.s32.totalorder %v870, 136
          %vm887 = vcmp.lt.s32.totalorder %v871, 136
          %vm888 = vcmp.lt.s32.totalorder %v872, 136
          %vm889 = vcmp.lt.s32.totalorder %v873, 136
          %vm890 = vcmp.lt.s32.totalorder %v874, 136
          %vm891 = vcmp.lt.s32.totalorder %v875, 136
          %vm892 = vcmp.lt.s32.totalorder %v876, 136
          %vm893 = vcmp.lt.s32.totalorder %v877, 136
          %vm894 = vcmp.lt.s32.totalorder %v878, 136
          %vm895 = vcmp.lt.s32.totalorder %v879, 136
          %v896 = vsel %vm880, %v541, -1e+30
          %v897 = vsel %vm881, %v546, -1e+30
          %v898 = vsel %vm882, %v551, -1e+30
          %v899 = vsel %vm883, %v556, -1e+30
          %v900 = vsel %vm884, %v561, -1e+30
          %v901 = vsel %vm885, %v566, -1e+30
          %v902 = vsel %vm886, %v571, -1e+30
          %v903 = vsel %vm887, %v576, -1e+30
          %v904 = vsel %vm888, %v581, -1e+30
          %v905 = vsel %vm889, %v586, -1e+30
          %v906 = vsel %vm890, %v591, -1e+30
          %v907 = vsel %vm891, %v596, -1e+30
          %v908 = vsel %vm892, %v601, -1e+30
          %v909 = vsel %vm893, %v606, -1e+30
          %v910 = vsel %vm894, %v611, -1e+30
          %v911 = vsel %vm895, %v616, -1e+30
          %v912 = vld [vmem:[#allocation6] sm:$0x1]
          %v913 = vsub.f32 %v896, 2.0
          %v914 = vsub.f32 %v897, 2.0
          %v915 = vsub.f32 %v898, 2.0
          %v916 = vsub.f32 %v899, 2.0
          %v917 = vsub.f32 %v900, 2.0
          %v918 = vsub.f32 %v901, 2.0
          %v919 = vsub.f32 %v902, 2.0
          %v920 = vsub.f32 %v903, 2.0
          %v921 = vsub.f32 %v904, 2.0
          %v922 = vsub.f32 %v905, 2.0
          %v923 = vsub.f32 %v906, 2.0
          %v924 = vsub.f32 %v907, 2.0
          %v925 = vsub.f32 %v908, 2.0
          %v926 = vsub.f32 %v909, 2.0
          %v927 = vsub.f32 %v910, 2.0
          %v928 = vsub.f32 %v911, 2.0
          %v929 = vmul.f32 %v913, 1.442695
          %v930 = vpow.pop %v929
          %v931 = vmul.f32 %v914, 1.442695
          %v932 = vpow.pop %v931
          %v933 = vmul.f32 %v915, 1.442695
          %v934 = vpow.pop %v933
          %v935 = vmul.f32 %v916, 1.442695
          %v936 = vpow.pop %v935
          %v937 = vmul.f32 %v917, 1.442695
          %v938 = vpow.pop %v937
          %v939 = vmul.f32 %v918, 1.442695
          %v940 = vpow.pop %v939
          %v941 = vmul.f32 %v919, 1.442695
          %v942 = vpow.pop %v941
          %v943 = vmul.f32 %v920, 1.442695
          %v944 = vpow.pop %v943
          %v945 = vmul.f32 %v921, 1.442695
          %v946 = vpow.pop %v945
          %v947 = vmul.f32 %v922, 1.442695
          %v948 = vpow.pop %v947
          %v949 = vmul.f32 %v923, 1.442695
          %v950 = vpow.pop %v949
          %v951 = vmul.f32 %v924, 1.442695
          %v952 = vpow.pop %v951
          %v953 = vmul.f32 %v925, 1.442695
          %v954 = vpow.pop %v953
          %v955 = vmul.f32 %v926, 1.442695
          %v956 = vpow.pop %v955
          %v957 = vmul.f32 %v927, 1.442695
          %v958 = vpow.pop %v957
          %v959 = vmul.f32 %v928, 1.442695
          %v960 = vpow.pop %v959
          %v961 = vadd.f32 %v930, %v932
          %v962 = vadd.f32 %v961, %v934
          %v963 = vadd.f32 %v962, %v936
          %v964 = vadd.f32 %v963, %v938
          %v965 = vadd.f32 %v964, %v940
          %v966 = vadd.f32 %v965, %v942
          %v967 = vadd.f32 %v966, %v944
          %v968 = vadd.f32 %v967, %v946
          %v969 = vadd.f32 %v968, %v948
          %v970 = vadd.f32 %v969, %v950
          %v971 = vadd.f32 %v970, %v952
          %v972 = vadd.f32 %v971, %v954
          %v973 = vadd.f32 %v972, %v956
          %v974 = vadd.f32 %v973, %v958
          %v975 = vadd.f32 %v974, %v960
          %v976 = vrot.slane %v975, 4
          %v977 = vadd.f32 %v975, %v976
          %v978 = vrot.slane %v977, 2
          %v979 = vadd.f32 %v977, %v978
          %v980 = vrot.slane %v979, 1
          %v981 = vadd.f32 %v979, %v980
          %v982 = vadd.f32 %v912, %v981
          %983 = vst [vmem:[#allocation6] sm:$0x1] %v982
        $region52: #{tpu_custom_call.1} parent=27 // pred_fallthru
          _
        %p984 = scmp.ge.s32.totalorder %s23, 2
        %p985 = scmp.ne.s32.totalorder %s23, 3
        %p986 = pnand %p984, %p985
        %p987 = pneg %p986
        // Predicated region
        $region53: #{tpu_custom_call.1} parent=27 // pred_check
          _
        $region54: #{tpu_custom_call.1} parent=27 // pred_check_branch
          %989 = sbr.rel (%p986) target = $region56
        $region55: #{tpu_custom_call.1} parent=27 // pred_region
          %v990 = vld [vmem:[#allocation6] sm:$0x1]
          %v991 = vsub.f32 %v541, 2.0
          %v992 = vsub.f32 %v546, 2.0
          %v993 = vsub.f32 %v551, 2.0
          %v994 = vsub.f32 %v556, 2.0
          %v995 = vsub.f32 %v561, 2.0
          %v996 = vsub.f32 %v566, 2.0
          %v997 = vsub.f32 %v571, 2.0
          %v998 = vsub.f32 %v576, 2.0
          %v999 = vsub.f32 %v581, 2.0
          %v1000 = vsub.f32 %v586, 2.0
          %v1001 = vsub.f32 %v591, 2.0
          %v1002 = vsub.f32 %v596, 2.0
          %v1003 = vsub.f32 %v601, 2.0
          %v1004 = vsub.f32 %v606, 2.0
          %v1005 = vsub.f32 %v611, 2.0
          %v1006 = vsub.f32 %v616, 2.0
          %v1007 = vmul.f32 %v991, 1.442695
          %v1008 = vpow.pop %v1007
          %v1009 = vmul.f32 %v992, 1.442695
          %v1010 = vpow.pop %v1009
          %v1011 = vmul.f32 %v993, 1.442695
          %v1012 = vpow.pop %v1011
          %v1013 = vmul.f32 %v994, 1.442695
          %v1014 = vpow.pop %v1013
          %v1015 = vmul.f32 %v995, 1.442695
          %v1016 = vpow.pop %v1015
          %v1017 = vmul.f32 %v996, 1.442695
          %v1018 = vpow.pop %v1017
          %v1019 = vmul.f32 %v997, 1.442695
          %v1020 = vpow.pop %v1019
          %v1021 = vmul.f32 %v998, 1.442695
          %v1022 = vpow.pop %v1021
          %v1023 = vmul.f32 %v999, 1.442695
          %v1024 = vpow.pop %v1023
          %v1025 = vmul.f32 %v1000, 1.442695
          %v1026 = vpow.pop %v1025
          %v1027 = vmul.f32 %v1001, 1.442695
          %v1028 = vpow.pop %v1027
          %v1029 = vmul.f32 %v1002, 1.442695
          %v1030 = vpow.pop %v1029
          %v1031 = vmul.f32 %v1003, 1.442695
          %v1032 = vpow.pop %v1031
          %v1033 = vmul.f32 %v1004, 1.442695
          %v1034 = vpow.pop %v1033
          %v1035 = vmul.f32 %v1005, 1.442695
          %v1036 = vpow.pop %v1035
          %v1037 = vmul.f32 %v1006, 1.442695
          %v1038 = vpow.pop %v1037
          %v1039 = vadd.f32 %v1008, %v1010
          %v1040 = vadd.f32 %v1039, %v1012
          %v1041 = vadd.f32 %v1040, %v1014
          %v1042 = vadd.f32 %v1041, %v1016
          %v1043 = vadd.f32 %v1042, %v1018
          %v1044 = vadd.f32 %v1043, %v1020
          %v1045 = vadd.f32 %v1044, %v1022
          %v1046 = vadd.f32 %v1045, %v1024
          %v1047 = vadd.f32 %v1046, %v1026
          %v1048 = vadd.f32 %v1047, %v1028
          %v1049 = vadd.f32 %v1048, %v1030
          %v1050 = vadd.f32 %v1049, %v1032
          %v1051 = vadd.f32 %v1050, %v1034
          %v1052 = vadd.f32 %v1051, %v1036
          %v1053 = vadd.f32 %v1052, %v1038
          %v1054 = vrot.slane %v1053, 4
          %v1055 = vadd.f32 %v1053, %v1054
          %v1056 = vrot.slane %v1055, 2
          %v1057 = vadd.f32 %v1055, %v1056
          %v1058 = vrot.slane %v1057, 1
          %v1059 = vadd.f32 %v1057, %v1058
          %v1060 = vadd.f32 %v990, %v1059
          %1061 = vst [vmem:[#allocation6] sm:$0x1] %v1060
        $region56: #{tpu_custom_call.1} parent=27 // pred_fallthru
          _
        // Predicated region
        $region57: #{tpu_custom_call.1} parent=27 // pred_check
          %p1062 = pneg %p840
        $region58: #{tpu_custom_call.1} parent=27 // pred_check_branch
          %1064 = sbr.rel (%p1062) target = $region60
        $region59: #{tpu_custom_call.1} parent=27 // pred_region
          %v1065 = vld [vmem:[#allocation3] sm:$0x1]
          %v1066 = vld [vmem:[#allocation4] sm:$0x1]
          %v1067 = vlog2.pop %v1066
          %v1068 = vmul.f32 %v1067, 0.6931472
          %v1069 = vadd.f32 %v1065, %v1068
          %v1070 = vld [vmem:[#allocation5] sm:$0x1]
          %v1071 = vld [vmem:[#allocation6] sm:$0x1]
          %v1072 = vlog2.pop %v1071
          %v1073 = vmul.f32 %v1072, 0.6931472
          %v1074 = vadd.f32 %v1070, %v1073
          %v1075 = vsub.f32 %v1069, 5.2983174
          %v1076 = vsub.f32 0.0, %v1075
          %v1077 = vrcp.pop 4.0
          %v1078 = vmul.f32 %v1076, %v1077
          %v1079 = vsub.f32 %v1074, 4.912655
          %v1080 = vsub.f32 0.0, %v1079
          %v1081 = vrcp.pop 2.0
          %v1082 = vmul.f32 %v1080, %v1081
          %v1083 = vsub.f32 %v1078, %v1082
          %1084 = vst [vmem:[#allocation12] sm:$0x1] %v1083
        $region60: #{tpu_custom_call.1} parent=27 // pred_fallthru
          _
        // Predicated region
        $region61: #{tpu_custom_call.1} parent=27 // pred_check
          %p1085 = pneg %p100
        $region62: #{tpu_custom_call.1} parent=27 // pred_check_branch
          %1087 = sbr.rel (%p1085) target = $region64
        $region63: #{tpu_custom_call.1} parent=27 // pred_region
          %s1089 = ssub.s32 16, 16
          %1090 = vsyncadd [#allocation9], %s1089
          %s1091 = smul.addr %s22, 16
          %s1092 = scalar_lea.hbm %s2, %s1091
          %s1094 = sshll.u32 [#allocation12], 4
          %s1095 = int_to_ptr.vmem [resolvable:$true] %s1094
          %1097 = dma.vmem_to_hbm [thread:$0]  %s1095, 16, %s1092, [#allocation9]
        $region64: #{tpu_custom_call.1} parent=27 // pred_fallthru
          _
        // Predicated region
        $region65: #{tpu_custom_call.1} parent=27 // pred_check
          %p1098 = pneg %p100
        $region66: #{tpu_custom_call.1} parent=27 // pred_check_branch
          %1100 = sbr.rel (%p1098) target = $region68
        $region67: #{tpu_custom_call.1} parent=27 // pred_region
          %1101 = dma.done [#allocation9], 16
        $region68: #{tpu_custom_call.1} parent=27 // pred_fallthru
          _
      $region28: #{tpu_custom_call.1} parent=5 // pred_fallthru
        _
      %p1102 = scmp.le.s32.totalorder 2, %s13
      // Predicated region
      $region69: #{tpu_custom_call.1} parent=5 // pred_check
        %p1103 = pneg %p1102
      $region70: #{tpu_custom_call.1} parent=5 // pred_check_branch
        %1105 = sbr.rel (%p1103) target = $region72
      $region71: #{tpu_custom_call.1} parent=5 // pred_region
        %s1106 = ssub.s32 %s13, 2
      $region72: #{tpu_custom_call.1} parent=5 // pred_fallthru
        _
    $region6: #{tpu_custom_call.1} parent=1 // loop_footer
      %s17 = sadd.s32 1, %s13
    $region7: #{tpu_custom_call.1} parent=1 // loop_footer_branch
      %12 = sbr.rel target = $region3
    $region8: #{tpu_custom_call.1} parent=1 // loop_exit
      _
    %1107 = vsyncpa [#allocation8], 1
    %s1108 = scalar_lea.sflag [#allocation8], 1
    %1109 = vsyncpa %s1108, 1
    %1110 = vsyncpa [#allocation11], 1
    %s1111 = scalar_lea.sflag [#allocation11], 1
    %1112 = vsyncpa %s1111, 1
    %1113 = vsyncpa [#allocation9], 1
    %s1114 = scalar_lea.sflag [#allocation9], 1
    %1115 = vsyncpa %s1114, 1

</llo_original>
